<compile_context>
chip_gen: v5e
topology: v5e:2x2
jax: 0.10.0
libtpu: 0.0.40
codegen_flags: <defaults>
</compile_context>

<pallas_src>
import jax
import jax.numpy as jnp
from jax.experimental import pallas as pl
from jax.experimental.pallas import tpu as pltpu


_STEP_TARGET_BYTES = 4 << 20      # aim for a few MiB of HBM traffic per grid step
_FALLBACK_PHYS_VMEM = 64 << 20    # assume v7x-sized VMEM when the query is unavailable


def _divisors(n):
    return [d for d in range(1, n + 1) if n % d == 0]


def _phys_vmem_bytes():
    get_info = getattr(pltpu, "get_tpu_info", None)
    if get_info is None:
        return _FALLBACK_PHYS_VMEM
    try:
        cap = getattr(get_info(), "vmem_capacity_bytes", None)
        return int(cap) if cap else _FALLBACK_PHYS_VMEM
    except Exception:
        return _FALLBACK_PHYS_VMEM


def _pick_w_tile(C, W, r, itemsize, budget, use_matmul):
    """Width tile: lane-dense (multiple of 128) whenever W allows it."""
    dense = [d for d in _divisors(W) if d % 128 == 0]
    if not dense:
        return W                                   # full width; caller guards VMEM fit
    if use_matmul:
        # Keep the permutation-matmul contraction (w_tile*r lanes) small enough that the
        # MXU work per HBM byte stays below the roofline on v6e/v7x.
        n_cap = 1024 if itemsize <= 2 else 512
        cand = [d for d in dense if d * r <= n_cap] or dense[:1]
    else:
        fits = [d for d in dense if 4 * C * d * itemsize <= budget] or dense[:1]
        cand = [d for d in fits if d * r <= 4096] or [min(fits)]
    return max(cand)


def _pick_b_tile(B, C, c_long, w_tile, r, itemsize, budget, p_bytes, w_steps):
    """Fold batch rows until a grid step moves a few MiB, keeping sublanes dense."""
    per_b = 2 * C * w_tile * itemsize              # in + out HBM bytes per batch element
    legal = []
    for d in _divisors(B):
        if d != B and (d * c_long) % 8 != 0:
            continue                               # would give sublane-masked output stores
        if 2 * d * per_b + 2 * p_bytes > budget:
            continue                               # double-buffered blocks + resident perm
        legal.append(d)
    if not legal:
        legal = [B]                                # full batch is always layout-legal
    reach = [d for d in legal if d * per_b >= _STEP_TARGET_BYTES]
    b = min(reach) if reach else max(legal)
    # Keep >= 2 grid steps so both v7x TensorCores get work whenever the shape allows.
    if w_steps == 1 and B // b == 1 and B > 1:
        smaller = [d for d in legal if d <= B // 2]
        if smaller:
            b = max(smaller)
    return b


def pixel_shuffle_1d(x, upscale_factor):
    """1-D pixel shuffle: (B, C, W) -> (B, C // r, W * r)."""
    B, C, W = x.shape
    r = int(upscale_factor)
    if C % r != 0:
        raise ValueError("channel count must be divisible by upscale_factor")
    if r == 1:
        return x
    c_long = C // r
    itemsize = jnp.dtype(x.dtype).itemsize

    phys = _phys_vmem_bytes()
    budget = min(max(phys // 3, 24 << 20), 56 << 20)   # ~24 MiB on v7x, ~42 MiB on v5e/v6e

    # MXU permutation path: bit-exact for bf16 (operands are native MXU inputs, products are
    # x*1.0 / x*0.0, accumulation in f32).  f32 stays on the in-register relayout path: a pure
    # data-movement op must be bit-exact and the default f32 matmul lowering may truncate.
    # TODO(synk): route f32 through the MXU permutation too once a non-truncating f32 matmul
    # can be guaranteed in the Mosaic lowering.
    use_matmul = (x.dtype == jnp.bfloat16) and (1 < r <= 8)

    w_tile = _pick_w_tile(C, W, r, itemsize, budget, use_matmul)

    # Full-width fallback that would blow the VMEM budget (v7x's 64 MiB hits first): pad W to
    # a multiple of 128 so a lane-dense tiling exists, shuffle, drop the padded output tail.
    if w_tile == W and W % 128 != 0 and 4 * C * W * itemsize > budget:
        w_pad = ((W + 127) // 128) * 128
        x_pad = jnp.pad(x, ((0, 0), (0, 0), (0, w_pad - W)))
        return pixel_shuffle_1d(x_pad, r)[:, :, : W * r]

    n_lanes = w_tile * r
    p_bytes = n_lanes * n_lanes * itemsize if use_matmul else 0
    w_steps = W // w_tile
    b_tile = _pick_b_tile(B, C, c_long, w_tile, r, itemsize, budget, p_bytes, w_steps)
    grid = (B // b_tile, W // w_tile)

    rows_in = b_tile * C
    rows_out = b_tile * c_long

    # Flatten (batch, channel) rows on both sides: output sublane dim = b_tile*c_long.
    x2 = x.reshape(B * C, W)
    out2_shape = jax.ShapeDtypeStruct((B * c_long, W * r), x.dtype)

    block_bytes = 2 * (rows_in * w_tile + rows_out * w_tile * r) * itemsize + 2 * p_bytes
    vmem_limit = int(min(max(block_bytes + (4 << 20), 16 << 20), max(phys, 32 << 20)))
    cparams = pltpu.CompilerParams(
        dimension_semantics=("parallel", "parallel"),
        vmem_limit_bytes=vmem_limit,
    )

    if use_matmul:
        # perm[j, l] = 1 iff concat-layout lane j feeds output lane l,
        # i.e. j == (l % r) * w_tile + l // r.  Constant index_map -> fetched once, resident.
        lane = jnp.arange(n_lanes, dtype=jnp.int32)
        src = (lane % r) * w_tile + lane // r
        perm = (jnp.arange(n_lanes, dtype=jnp.int32)[:, None] == src[None, :]).astype(x.dtype)

        def kernel(x_ref, p_ref, o_ref):
            xt = x_ref[...].reshape(b_tile, r, c_long, w_tile)
            # Lane-concatenate the r phase slabs (whole-row moves only; the tiny size-r axis
            # never lands on the lane dim), then let the idle MXU apply the lane permutation.
            xcat = jnp.concatenate([xt[:, k] for k in range(r)], axis=-1)
            xcat = xcat.reshape(rows_out, n_lanes)
            y = jnp.dot(xcat, p_ref[...], preferred_element_type=jnp.float32)
            o_ref[...] = y.astype(o_ref.dtype)

        out2 = pl.pallas_call(
            kernel,
            out_shape=out2_shape,
            grid=grid,
            in_specs=[
                pl.BlockSpec((rows_in, w_tile), lambda b, w: (b, w)),
                pl.BlockSpec((n_lanes, n_lanes), lambda b, w: (0, 0)),
            ],
            out_specs=pl.BlockSpec((rows_out, w_tile * r), lambda b, w: (b, w)),
            compiler_params=cparams,
            cost_estimate=pl.CostEstimate(
                flops=int(2 * B * c_long * W * r * n_lanes),
                transcendentals=0,
                bytes_accessed=int(2 * B * C * W * itemsize + p_bytes),
            ),
        )(x2, perm)
    else:
        def kernel(x_ref, o_ref):
            xt = x_ref[...].reshape(b_tile, r, c_long, w_tile)
            y = jnp.transpose(xt, (0, 2, 3, 1))            # (b_tile, c_long, w_tile, r)
            o_ref[...] = y.reshape(rows_out, w_tile * r)

        out2 = pl.pallas_call(
            kernel,
            out_shape=out2_shape,
            grid=grid,
            in_specs=[pl.BlockSpec((rows_in, w_tile), lambda b, w: (b, w))],
            out_specs=pl.BlockSpec((rows_out, w_tile * r), lambda b, w: (b, w)),
            compiler_params=cparams,
            cost_estimate=pl.CostEstimate(
                flops=0,
                transcendentals=0,
                bytes_accessed=int(2 * B * C * W * itemsize),
            ),
        )(x2)

    return out2.reshape(B, c_long, W * r)


def pixel_shuffle_1d_ref(x, upscale_factor):
    """Pure-JAX reference mirroring the PyTorch forward exactly."""
    B, C, W = x.shape
    r = upscale_factor
    c_long = C // r
    y = x.reshape(B, r, c_long, W)
    y = jnp.transpose(y, (0, 2, 3, 1))
    return y.reshape(B, c_long, r * W)


if __name__ == "__main__":
    key = jax.random.PRNGKey(0)
    k1, k2, k3 = jax.random.split(key, 3)

    # 1) Small shape matching the module's (batch, channel, length) convention.
    B, C, W, r = 2, 8, 16, 4
    x = jax.random.normal(k1, (B, C, W), dtype=jnp.float32)
    out = jax.block_until_ready(pixel_shuffle_1d(x, r))
    assert out.shape == (B, C // r, W * r) and out.dtype == x.dtype
    assert jnp.array_equal(out, pixel_shuffle_1d_ref(x, r)), "f32 small-shape mismatch"

    # 2) Lane-dense, batch/width-tiled f32 path (multi-step grid).
    B2, C2, W2, r2 = 2, 64, 1024, 4
    x2 = jax.random.normal(k2, (B2, C2, W2), dtype=jnp.float32)
    out2 = jax.block_until_ready(pixel_shuffle_1d(x2, r2))
    assert jnp.array_equal(out2, pixel_shuffle_1d_ref(x2, r2)), "f32 tiled-path mismatch"

    # 3) bf16 path: the interleave runs on the MXU via the resident permutation matrix.
    B3, C3, W3, r3 = 2, 8, 256, 2
    x3 = jax.random.normal(k3, (B3, C3, W3), dtype=jnp.bfloat16)
    out3 = jax.block_until_ready(pixel_shuffle_1d(x3, r3))
    assert jnp.array_equal(out3, pixel_shuffle_1d_ref(x3, r3)), "bf16 MXU-path mismatch"

    print("KERNEL_OK")
</pallas_src>

<mosaic_0001>
module attributes {stable_mosaic.version = 11 : i64} {
  func.func @kernel(%arg0: i32, %arg1: i32, %arg2: memref<16x16xf32, #tpu.memory_space<vmem>>, %arg3: memref<4x64xf32, #tpu.memory_space<vmem>>) attributes {dimension_semantics = [#tpu.dimension_semantics<parallel>, #tpu.dimension_semantics<parallel>], iteration_bounds = array<i64: 1, 1>, scalar_prefetch = 0 : i64, scratch_operands = 0 : i64, tpu.core_type = #tpu.core_type<tc>, window_params = [{transform_indices = @transform_0, window_bounds = array<i64: 16, 16>}, {transform_indices = @transform_1, window_bounds = array<i64: 4, 64>}]} {
    %c0 = arith.constant 0 : index
    %c0_0 = arith.constant 0 : index
    %0 = vector.load %arg2[%c0, %c0_0] : memref<16x16xf32, #tpu.memory_space<vmem>>, vector<16x16xf32>
    %1 = vector.shape_cast %0 : vector<16x16xf32> to vector<2x4x2x16xf32>
    %2 = tpu.transpose %1, [0, 2, 3, 1] : vector<2x4x2x16xf32> -> vector<2x2x16x4xf32>
    %3 = vector.shape_cast %2 : vector<2x2x16x4xf32> to vector<4x64xf32>
    %c0_1 = arith.constant 0 : index
    %c0_2 = arith.constant 0 : index
    %4 = vector.load %arg3[%c0_1, %c0_2] : memref<4x64xf32, #tpu.memory_space<vmem>>, vector<4x64xf32>
    tpu.vector_store %arg3[%c0_1, %c0_2], %3 {strides = array<i32>} : memref<4x64xf32, #tpu.memory_space<vmem>>, vector<4x64xf32>,
    return
  }
  func.func @transform_0(%arg0: i32, %arg1: i32) -> (i32, i32) {
    %c0_i32 = arith.constant 0 : i32
    return %arg0, %arg1 : i32, i32
  }
  func.func @transform_1(%arg0: i32, %arg1: i32) -> (i32, i32) {
    %c0_i32 = arith.constant 0 : i32
    return %arg0, %arg1 : i32, i32
  }
}

</mosaic_0001>

<llo_original>
// kernel: tpu_custom_call.1
$region0: #{tpu_custom_call.1}
  #allocation0 [shape = 'u32[]', space=smem, size = 0x4, offset = 0x4, fixed_abs, tag = 'smem constant byte address 0x4 - core index']
  #allocation1 [shape = 'u32[72,128]{1,0:T(1,128)}', space=vmem, size = 0x9000, scoped, tag = 'internal scratch']
  %s0 = inlined_call_operand.hbm [shape: f32[16,16], index: 0, kind: input, shape index: {}]
  %s1 = inlined_call_operand.hbm [shape: f32[4,64], index: 1, kind: output, shape index: {}]
  %s2 = sld [smem:[#allocation0]]
  $region18: #{tpu_custom_call.1} parent=0
    _
  %s4 = ssub.s32 1, %s2
  %s5 = scalar_select 0, %s4, %s2
  $region1: #{tpu_custom_call.1} parent=0
    #allocation2 [shape = 'u8[8192]{0}', space=vmem, size = 0x2000, scoped, tag = 'input window, operand 0, single buffered']
    #allocation3 [shape = 's32[1]{0}', space=sflag, size = 0x4, scoped, tag = 'scoped memory for tpu_custom_call.1']
    #allocation4 [shape = 's32[1]{0}', space=sflag, size = 0x4, scoped, tag = 'scoped memory for tpu_custom_call.1']
    #allocation5 [shape = 'u8[2048]{0}', space=vmem, size = 0x800, scoped, tag = 'output window, operand 0, single buffered']
    %6 = vsyncpa [#allocation3], 0
    %7 = vsyncpa [#allocation4], 0
    // Predicated region
    $region2: #{tpu_custom_call.1} parent=1 // pred_check
      _
    $region3: #{tpu_custom_call.1} parent=1 // pred_check_branch
      %9 = sbr.rel (0) target = $region5
    $region4: #{tpu_custom_call.1} parent=1 // pred_region
      %11 = vsyncadd [#allocation3], 0
      %s12 = sshll.u32 %s0, 4
      %s13 = int_to_ptr.hbm [resolvable:$true] %s12
      %s14 = sshll.u32 [#allocation2], 4
      %s15 = int_to_ptr.vmem [resolvable:$true] %s14
      %20 = dma.hbm_to_vmem [thread:$0]  %s13, 256, %s15, [#allocation3], 128, 128, 8
    $region5: #{tpu_custom_call.1} parent=1 // pred_fallthru
      _
    // Predicated region
    $region6: #{tpu_custom_call.1} parent=1 // pred_check
      _
    $region7: #{tpu_custom_call.1} parent=1 // pred_check_branch
      %22 = sbr.rel (0) target = $region9
    $region8: #{tpu_custom_call.1} parent=1 // pred_region
      %24 = dma.done [#allocation3], 256
    $region9: #{tpu_custom_call.1} parent=1 // pred_fallthru
      _
    %v25 = vld [vmem:[#allocation2] sm:$0xff]
    %v26 = vld [vmem:[#allocation2 + $0x8] sm:$0xff]
    %v29 = vrot.slane %v25, 2
    %v30 = vrot.slane %v25, 4
    %v31 = vrot.slane %v25, 6
    %v32 = vrot.slane %v26, 2
    %v33 = vrot.slane %v26, 4
    %v34 = vrot.slane %v26, 6
    %41 = vxpose.xlu0.b32.start [1/16] %v25, 128
    %42 = vxpose.xlu0.b32.cont [2/16] 0.0, 128
    %43 = vxpose.xlu0.b32.cont [3/16] 0.0, 128
    %44 = vxpose.xlu0.b32.cont [4/16] 0.0, 128
    %45 = vxpose.xlu0.b32.cont [5/16] 0.0, 128
    %46 = vxpose.xlu0.b32.cont [6/16] 0.0, 128
    %47 = vxpose.xlu0.b32.cont [7/16] 0.0, 128
    %48 = vxpose.xlu0.b32.cont [8/16] 0.0, 128
    %49 = vxpose.xlu0.b32.cont [9/16] 0.0, 128
    %50 = vxpose.xlu0.b32.cont [10/16] 0.0, 128
    %51 = vxpose.xlu0.b32.cont [11/16] 0.0, 128
    %52 = vxpose.xlu0.b32.cont [12/16] 0.0, 128
    %53 = vxpose.xlu0.b32.cont [13/16] 0.0, 128
    %54 = vxpose.xlu0.b32.cont [14/16] 0.0, 128
    %55 = vxpose.xlu0.b32.cont [15/16] 0.0, 128
    %56 = vxpose.xlu0.b32.end [16/16] 0.0, 128
    %v57 = vpop.trf.xlu0
    %v58 = vpop.trf.xlu0
    %v59 = vpop.trf.xlu0
    %v60 = vpop.trf.xlu0
    %v61 = vpop.trf.xlu0
    %v62 = vpop.trf.xlu0
    %v63 = vpop.trf.xlu0
    %v64 = vpop.trf.xlu0
    %v65 = vpop.trf.xlu0
    %v66 = vpop.trf.xlu0
    %v67 = vpop.trf.xlu0
    %v68 = vpop.trf.xlu0
    %v69 = vpop.trf.xlu0
    %v70 = vpop.trf.xlu0
    %v71 = vpop.trf.xlu0
    %v72 = vpop.trf.xlu0
    %73 = vxpose.xlu0.b32.start [1/16] %v29, 128
    %74 = vxpose.xlu0.b32.cont [2/16] 0.0, 128
    %75 = vxpose.xlu0.b32.cont [3/16] 0.0, 128
    %76 = vxpose.xlu0.b32.cont [4/16] 0.0, 128
    %77 = vxpose.xlu0.b32.cont [5/16] 0.0, 128
    %78 = vxpose.xlu0.b32.cont [6/16] 0.0, 128
    %79 = vxpose.xlu0.b32.cont [7/16] 0.0, 128
    %80 = vxpose.xlu0.b32.cont [8/16] 0.0, 128
    %81 = vxpose.xlu0.b32.cont [9/16] 0.0, 128
    %82 = vxpose.xlu0.b32.cont [10/16] 0.0, 128
    %83 = vxpose.xlu0.b32.cont [11/16] 0.0, 128
    %84 = vxpose.xlu0.b32.cont [12/16] 0.0, 128
    %85 = vxpose.xlu0.b32.cont [13/16] 0.0, 128
    %86 = vxpose.xlu0.b32.cont [14/16] 0.0, 128
    %87 = vxpose.xlu0.b32.cont [15/16] 0.0, 128
    %88 = vxpose.xlu0.b32.end [16/16] 0.0, 128
    %v89 = vpop.trf.xlu0
    %v90 = vpop.trf.xlu0
    %v91 = vpop.trf.xlu0
    %v92 = vpop.trf.xlu0
    %v93 = vpop.trf.xlu0
    %v94 = vpop.trf.xlu0
    %v95 = vpop.trf.xlu0
    %v96 = vpop.trf.xlu0
    %v97 = vpop.trf.xlu0
    %v98 = vpop.trf.xlu0
    %v99 = vpop.trf.xlu0
    %v100 = vpop.trf.xlu0
    %v101 = vpop.trf.xlu0
    %v102 = vpop.trf.xlu0
    %v103 = vpop.trf.xlu0
    %v104 = vpop.trf.xlu0
    %105 = vxpose.xlu0.b32.start [1/16] %v30, 128
    %106 = vxpose.xlu0.b32.cont [2/16] 0.0, 128
    %107 = vxpose.xlu0.b32.cont [3/16] 0.0, 128
    %108 = vxpose.xlu0.b32.cont [4/16] 0.0, 128
    %109 = vxpose.xlu0.b32.cont [5/16] 0.0, 128
    %110 = vxpose.xlu0.b32.cont [6/16] 0.0, 128
    %111 = vxpose.xlu0.b32.cont [7/16] 0.0, 128
    %112 = vxpose.xlu0.b32.cont [8/16] 0.0, 128
    %113 = vxpose.xlu0.b32.cont [9/16] 0.0, 128
    %114 = vxpose.xlu0.b32.cont [10/16] 0.0, 128
    %115 = vxpose.xlu0.b32.cont [11/16] 0.0, 128
    %116 = vxpose.xlu0.b32.cont [12/16] 0.0, 128
    %117 = vxpose.xlu0.b32.cont [13/16] 0.0, 128
    %118 = vxpose.xlu0.b32.cont [14/16] 0.0, 128
    %119 = vxpose.xlu0.b32.cont [15/16] 0.0, 128
    %120 = vxpose.xlu0.b32.end [16/16] 0.0, 128
    %v121 = vpop.trf.xlu0
    %v122 = vpop.trf.xlu0
    %v123 = vpop.trf.xlu0
    %v124 = vpop.trf.xlu0
    %v125 = vpop.trf.xlu0
    %v126 = vpop.trf.xlu0
    %v127 = vpop.trf.xlu0
    %v128 = vpop.trf.xlu0
    %v129 = vpop.trf.xlu0
    %v130 = vpop.trf.xlu0
    %v131 = vpop.trf.xlu0
    %v132 = vpop.trf.xlu0
    %v133 = vpop.trf.xlu0
    %v134 = vpop.trf.xlu0
    %v135 = vpop.trf.xlu0
    %v136 = vpop.trf.xlu0
    %137 = vxpose.xlu0.b32.start [1/16] %v31, 128
    %138 = vxpose.xlu0.b32.cont [2/16] 0.0, 128
    %139 = vxpose.xlu0.b32.cont [3/16] 0.0, 128
    %140 = vxpose.xlu0.b32.cont [4/16] 0.0, 128
    %141 = vxpose.xlu0.b32.cont [5/16] 0.0, 128
    %142 = vxpose.xlu0.b32.cont [6/16] 0.0, 128
    %143 = vxpose.xlu0.b32.cont [7/16] 0.0, 128
    %144 = vxpose.xlu0.b32.cont [8/16] 0.0, 128
    %145 = vxpose.xlu0.b32.cont [9/16] 0.0, 128
    %146 = vxpose.xlu0.b32.cont [10/16] 0.0, 128
    %147 = vxpose.xlu0.b32.cont [11/16] 0.0, 128
    %148 = vxpose.xlu0.b32.cont [12/16] 0.0, 128
    %149 = vxpose.xlu0.b32.cont [13/16] 0.0, 128
    %150 = vxpose.xlu0.b32.cont [14/16] 0.0, 128
    %151 = vxpose.xlu0.b32.cont [15/16] 0.0, 128
    %152 = vxpose.xlu0.b32.end [16/16] 0.0, 128
    %v153 = vpop.trf.xlu0
    %v154 = vpop.trf.xlu0
    %v155 = vpop.trf.xlu0
    %v156 = vpop.trf.xlu0
    %v157 = vpop.trf.xlu0
    %v158 = vpop.trf.xlu0
    %v159 = vpop.trf.xlu0
    %v160 = vpop.trf.xlu0
    %v161 = vpop.trf.xlu0
    %v162 = vpop.trf.xlu0
    %v163 = vpop.trf.xlu0
    %v164 = vpop.trf.xlu0
    %v165 = vpop.trf.xlu0
    %v166 = vpop.trf.xlu0
    %v167 = vpop.trf.xlu0
    %v168 = vpop.trf.xlu0
    %169 = vxpose.xlu0.b32.start [1/16] %v26, 128
    %170 = vxpose.xlu0.b32.cont [2/16] 0.0, 128
    %171 = vxpose.xlu0.b32.cont [3/16] 0.0, 128
    %172 = vxpose.xlu0.b32.cont [4/16] 0.0, 128
    %173 = vxpose.xlu0.b32.cont [5/16] 0.0, 128
    %174 = vxpose.xlu0.b32.cont [6/16] 0.0, 128
    %175 = vxpose.xlu0.b32.cont [7/16] 0.0, 128
    %176 = vxpose.xlu0.b32.cont [8/16] 0.0, 128
    %177 = vxpose.xlu0.b32.cont [9/16] 0.0, 128
    %178 = vxpose.xlu0.b32.cont [10/16] 0.0, 128
    %179 = vxpose.xlu0.b32.cont [11/16] 0.0, 128
    %180 = vxpose.xlu0.b32.cont [12/16] 0.0, 128
    %181 = vxpose.xlu0.b32.cont [13/16] 0.0, 128
    %182 = vxpose.xlu0.b32.cont [14/16] 0.0, 128
    %183 = vxpose.xlu0.b32.cont [15/16] 0.0, 128
    %184 = vxpose.xlu0.b32.end [16/16] 0.0, 128
    %v185 = vpop.trf.xlu0
    %v186 = vpop.trf.xlu0
    %v187 = vpop.trf.xlu0
    %v188 = vpop.trf.xlu0
    %v189 = vpop.trf.xlu0
    %v190 = vpop.trf.xlu0
    %v191 = vpop.trf.xlu0
    %v192 = vpop.trf.xlu0
    %v193 = vpop.trf.xlu0
    %v194 = vpop.trf.xlu0
    %v195 = vpop.trf.xlu0
    %v196 = vpop.trf.xlu0
    %v197 = vpop.trf.xlu0
    %v198 = vpop.trf.xlu0
    %v199 = vpop.trf.xlu0
    %v200 = vpop.trf.xlu0
    %201 = vxpose.xlu0.b32.start [1/16] %v32, 128
    %202 = vxpose.xlu0.b32.cont [2/16] 0.0, 128
    %203 = vxpose.xlu0.b32.cont [3/16] 0.0, 128
    %204 = vxpose.xlu0.b32.cont [4/16] 0.0, 128
    %205 = vxpose.xlu0.b32.cont [5/16] 0.0, 128
    %206 = vxpose.xlu0.b32.cont [6/16] 0.0, 128
    %207 = vxpose.xlu0.b32.cont [7/16] 0.0, 128
    %208 = vxpose.xlu0.b32.cont [8/16] 0.0, 128
    %209 = vxpose.xlu0.b32.cont [9/16] 0.0, 128
    %210 = vxpose.xlu0.b32.cont [10/16] 0.0, 128
    %211 = vxpose.xlu0.b32.cont [11/16] 0.0, 128
    %212 = vxpose.xlu0.b32.cont [12/16] 0.0, 128
    %213 = vxpose.xlu0.b32.cont [13/16] 0.0, 128
    %214 = vxpose.xlu0.b32.cont [14/16] 0.0, 128
    %215 = vxpose.xlu0.b32.cont [15/16] 0.0, 128
    %216 = vxpose.xlu0.b32.end [16/16] 0.0, 128
    %v217 = vpop.trf.xlu0
    %v218 = vpop.trf.xlu0
    %v219 = vpop.trf.xlu0
    %v220 = vpop.trf.xlu0
    %v221 = vpop.trf.xlu0
    %v222 = vpop.trf.xlu0
    %v223 = vpop.trf.xlu0
    %v224 = vpop.trf.xlu0
    %v225 = vpop.trf.xlu0
    %v226 = vpop.trf.xlu0
    %v227 = vpop.trf.xlu0
    %v228 = vpop.trf.xlu0
    %v229 = vpop.trf.xlu0
    %v230 = vpop.trf.xlu0
    %v231 = vpop.trf.xlu0
    %v232 = vpop.trf.xlu0
    %233 = vxpose.xlu0.b32.start [1/16] %v33, 128
    %234 = vxpose.xlu0.b32.cont [2/16] 0.0, 128
    %235 = vxpose.xlu0.b32.cont [3/16] 0.0, 128
    %236 = vxpose.xlu0.b32.cont [4/16] 0.0, 128
    %237 = vxpose.xlu0.b32.cont [5/16] 0.0, 128
    %238 = vxpose.xlu0.b32.cont [6/16] 0.0, 128
    %239 = vxpose.xlu0.b32.cont [7/16] 0.0, 128
    %240 = vxpose.xlu0.b32.cont [8/16] 0.0, 128
    %241 = vxpose.xlu0.b32.cont [9/16] 0.0, 128
    %242 = vxpose.xlu0.b32.cont [10/16] 0.0, 128
    %243 = vxpose.xlu0.b32.cont [11/16] 0.0, 128
    %244 = vxpose.xlu0.b32.cont [12/16] 0.0, 128
    %245 = vxpose.xlu0.b32.cont [13/16] 0.0, 128
    %246 = vxpose.xlu0.b32.cont [14/16] 0.0, 128
    %247 = vxpose.xlu0.b32.cont [15/16] 0.0, 128
    %248 = vxpose.xlu0.b32.end [16/16] 0.0, 128
    %v249 = vpop.trf.xlu0
    %v250 = vpop.trf.xlu0
    %v251 = vpop.trf.xlu0
    %v252 = vpop.trf.xlu0
    %v253 = vpop.trf.xlu0
    %v254 = vpop.trf.xlu0
    %v255 = vpop.trf.xlu0
    %v256 = vpop.trf.xlu0
    %v257 = vpop.trf.xlu0
    %v258 = vpop.trf.xlu0
    %v259 = vpop.trf.xlu0
    %v260 = vpop.trf.xlu0
    %v261 = vpop.trf.xlu0
    %v262 = vpop.trf.xlu0
    %v263 = vpop.trf.xlu0
    %v264 = vpop.trf.xlu0
    %265 = vxpose.xlu0.b32.start [1/16] %v34, 128
    %266 = vxpose.xlu0.b32.cont [2/16] 0.0, 128
    %267 = vxpose.xlu0.b32.cont [3/16] 0.0, 128
    %268 = vxpose.xlu0.b32.cont [4/16] 0.0, 128
    %269 = vxpose.xlu0.b32.cont [5/16] 0.0, 128
    %270 = vxpose.xlu0.b32.cont [6/16] 0.0, 128
    %271 = vxpose.xlu0.b32.cont [7/16] 0.0, 128
    %272 = vxpose.xlu0.b32.cont [8/16] 0.0, 128
    %273 = vxpose.xlu0.b32.cont [9/16] 0.0, 128
    %274 = vxpose.xlu0.b32.cont [10/16] 0.0, 128
    %275 = vxpose.xlu0.b32.cont [11/16] 0.0, 128
    %276 = vxpose.xlu0.b32.cont [12/16] 0.0, 128
    %277 = vxpose.xlu0.b32.cont [13/16] 0.0, 128
    %278 = vxpose.xlu0.b32.cont [14/16] 0.0, 128
    %279 = vxpose.xlu0.b32.cont [15/16] 0.0, 128
    %280 = vxpose.xlu0.b32.end [16/16] 0.0, 128
    %v281 = vpop.trf.xlu0
    %v282 = vpop.trf.xlu0
    %v283 = vpop.trf.xlu0
    %v284 = vpop.trf.xlu0
    %v285 = vpop.trf.xlu0
    %v286 = vpop.trf.xlu0
    %v287 = vpop.trf.xlu0
    %v288 = vpop.trf.xlu0
    %v289 = vpop.trf.xlu0
    %v290 = vpop.trf.xlu0
    %v291 = vpop.trf.xlu0
    %v292 = vpop.trf.xlu0
    %v293 = vpop.trf.xlu0
    %v294 = vpop.trf.xlu0
    %v295 = vpop.trf.xlu0
    %v296 = vpop.trf.xlu0
    %v297 = vrot.slane %v121, 4
    %vm298 = vcmask 1047556
    %v299 = vsel %vm298, %v297, %v57
    %v300 = vrot.slane %v57, 4
    %v301 = vsel %vm298, %v121, %v300
    %v303 = vunpack.c.l.s4 1983009808
    %v304 = vunpack.c.0.s8 %v303
    %v305 = vperm.slane %v299, %v304
    %v307 = vunpack.c.l.s4 1983009808
    %v308 = vunpack.c.0.s8 %v307
    %v309 = vperm.slane %v301, %v308
    %v310 = vrot.slane %v153, 4
    %v311 = vsel %vm298, %v310, %v89
    %v312 = vrot.slane %v89, 4
    %v313 = vsel %vm298, %v153, %v312
    %v315 = vunpack.c.l.s4 1983009808
    %v316 = vunpack.c.0.s8 %v315
    %v317 = vperm.slane %v311, %v316
    %v319 = vunpack.c.l.s4 1983009808
    %v320 = vunpack.c.0.s8 %v319
    %v321 = vperm.slane %v313, %v320
    %v322 = vrot.slane %v317, 4
    %v323 = vsel %vm298, %v322, %v305
    %v324 = vrot.slane %v305, 4
    %v325 = vsel %vm298, %v317, %v324
    %v327 = vunpack.c.l.s4 1934713408
    %v328 = vunpack.c.0.s8 %v327
    %v329 = vperm.slane %v323, %v328
    %v331 = vunpack.c.l.s4 1934713408
    %v332 = vunpack.c.0.s8 %v331
    %v333 = vperm.slane %v325, %v332
    %v334 = vrot.slane %v321, 4
    %v335 = vsel %vm298, %v334, %v309
    %v336 = vrot.slane %v309, 4
    %v337 = vsel %vm298, %v321, %v336
    %v339 = vunpack.c.l.s4 1934713408
    %v340 = vunpack.c.0.s8 %v339
    %v341 = vperm.slane %v335, %v340
    %v343 = vunpack.c.l.s4 1934713408
    %v344 = vunpack.c.0.s8 %v343
    %v345 = vperm.slane %v337, %v344
    %v346 = vrot.slane %v329, 4
    %v347 = vsel %vm298, 0.0, %v346
    %v348 = vrot.slane %v333, 4
    %v349 = vsel %vm298, 0.0, %v348
    %v350 = vrot.slane %v341, 4
    %v351 = vsel %vm298, 0.0, %v350
    %v352 = vrot.slane %v345, 4
    %v353 = vsel %vm298, 0.0, %v352
    %v354 = vrot.slane %v122, 4
    %v355 = vsel %vm298, %v354, %v58
    %v356 = vrot.slane %v58, 4
    %v357 = vsel %vm298, %v122, %v356
    %v359 = vunpack.c.l.s4 1983009808
    %v360 = vunpack.c.0.s8 %v359
    %v361 = vperm.slane %v355, %v360
    %v363 = vunpack.c.l.s4 1983009808
    %v364 = vunpack.c.0.s8 %v363
    %v365 = vperm.slane %v357, %v364
    %v366 = vrot.slane %v154, 4
    %v367 = vsel %vm298, %v366, %v90
    %v368 = vrot.slane %v90, 4
    %v369 = vsel %vm298, %v154, %v368
    %v371 = vunpack.c.l.s4 1983009808
    %v372 = vunpack.c.0.s8 %v371
    %v373 = vperm.slane %v367, %v372
    %v375 = vunpack.c.l.s4 1983009808
    %v376 = vunpack.c.0.s8 %v375
    %v377 = vperm.slane %v369, %v376
    %v378 = vrot.slane %v373, 4
    %v379 = vsel %vm298, %v378, %v361
    %v380 = vrot.slane %v361, 4
    %v381 = vsel %vm298, %v373, %v380
    %v383 = vunpack.c.l.s4 1934713408
    %v384 = vunpack.c.0.s8 %v383
    %v385 = vperm.slane %v379, %v384
    %v387 = vunpack.c.l.s4 1934713408
    %v388 = vunpack.c.0.s8 %v387
    %v389 = vperm.slane %v381, %v388
    %v390 = vrot.slane %v377, 4
    %v391 = vsel %vm298, %v390, %v365
    %v392 = vrot.slane %v365, 4
    %v393 = vsel %vm298, %v377, %v392
    %v395 = vunpack.c.l.s4 1934713408
    %v396 = vunpack.c.0.s8 %v395
    %v397 = vperm.slane %v391, %v396
    %v399 = vunpack.c.l.s4 1934713408
    %v400 = vunpack.c.0.s8 %v399
    %v401 = vperm.slane %v393, %v400
    %v402 = vrot.slane %v385, 4
    %v403 = vsel %vm298, 0.0, %v402
    %v404 = vrot.slane %v389, 4
    %v405 = vsel %vm298, 0.0, %v404
    %v406 = vrot.slane %v397, 4
    %v407 = vsel %vm298, 0.0, %v406
    %v408 = vrot.slane %v401, 4
    %v409 = vsel %vm298, 0.0, %v408
    %v410 = vrot.slane %v249, 4
    %v411 = vsel %vm298, %v410, %v185
    %v412 = vrot.slane %v185, 4
    %v413 = vsel %vm298, %v249, %v412
    %v415 = vunpack.c.l.s4 1983009808
    %v416 = vunpack.c.0.s8 %v415
    %v417 = vperm.slane %v411, %v416
    %v419 = vunpack.c.l.s4 1983009808
    %v420 = vunpack.c.0.s8 %v419
    %v421 = vperm.slane %v413, %v420
    %v422 = vrot.slane %v281, 4
    %v423 = vsel %vm298, %v422, %v217
    %v424 = vrot.slane %v217, 4
    %v425 = vsel %vm298, %v281, %v424
    %v427 = vunpack.c.l.s4 1983009808
    %v428 = vunpack.c.0.s8 %v427
    %v429 = vperm.slane %v423, %v428
    %v431 = vunpack.c.l.s4 1983009808
    %v432 = vunpack.c.0.s8 %v431
    %v433 = vperm.slane %v425, %v432
    %v434 = vrot.slane %v429, 4
    %v435 = vsel %vm298, %v434, %v417
    %v436 = vrot.slane %v417, 4
    %v437 = vsel %vm298, %v429, %v436
    %v439 = vunpack.c.l.s4 1934713408
    %v440 = vunpack.c.0.s8 %v439
    %v441 = vperm.slane %v435, %v440
    %v443 = vunpack.c.l.s4 1934713408
    %v444 = vunpack.c.0.s8 %v443
    %v445 = vperm.slane %v437, %v444
    %v446 = vrot.slane %v433, 4
    %v447 = vsel %vm298, %v446, %v421
    %v448 = vrot.slane %v421, 4
    %v449 = vsel %vm298, %v433, %v448
    %v451 = vunpack.c.l.s4 1934713408
    %v452 = vunpack.c.0.s8 %v451
    %v453 = vperm.slane %v447, %v452
    %v455 = vunpack.c.l.s4 1934713408
    %v456 = vunpack.c.0.s8 %v455
    %v457 = vperm.slane %v449, %v456
    %v458 = vrot.slane %v441, 4
    %v459 = vsel %vm298, 0.0, %v458
    %v460 = vrot.slane %v445, 4
    %v461 = vsel %vm298, 0.0, %v460
    %v462 = vrot.slane %v453, 4
    %v463 = vsel %vm298, 0.0, %v462
    %v464 = vrot.slane %v457, 4
    %v465 = vsel %vm298, 0.0, %v464
    %v466 = vrot.slane %v250, 4
    %v467 = vsel %vm298, %v466, %v186
    %v468 = vrot.slane %v186, 4
    %v469 = vsel %vm298, %v250, %v468
    %v471 = vunpack.c.l.s4 1983009808
    %v472 = vunpack.c.0.s8 %v471
    %v473 = vperm.slane %v467, %v472
    %v475 = vunpack.c.l.s4 1983009808
    %v476 = vunpack.c.0.s8 %v475
    %v477 = vperm.slane %v469, %v476
    %v478 = vrot.slane %v282, 4
    %v479 = vsel %vm298, %v478, %v218
    %v480 = vrot.slane %v218, 4
    %v481 = vsel %vm298, %v282, %v480
    %v483 = vunpack.c.l.s4 1983009808
    %v484 = vunpack.c.0.s8 %v483
    %v485 = vperm.slane %v479, %v484
    %v487 = vunpack.c.l.s4 1983009808
    %v488 = vunpack.c.0.s8 %v487
    %v489 = vperm.slane %v481, %v488
    %v490 = vrot.slane %v485, 4
    %v491 = vsel %vm298, %v490, %v473
    %v492 = vrot.slane %v473, 4
    %v493 = vsel %vm298, %v485, %v492
    %v495 = vunpack.c.l.s4 1934713408
    %v496 = vunpack.c.0.s8 %v495
    %v497 = vperm.slane %v491, %v496
    %v499 = vunpack.c.l.s4 1934713408
    %v500 = vunpack.c.0.s8 %v499
    %v501 = vperm.slane %v493, %v500
    %v502 = vrot.slane %v489, 4
    %v503 = vsel %vm298, %v502, %v477
    %v504 = vrot.slane %v477, 4
    %v505 = vsel %vm298, %v489, %v504
    %v507 = vunpack.c.l.s4 1934713408
    %v508 = vunpack.c.0.s8 %v507
    %v509 = vperm.slane %v503, %v508
    %v511 = vunpack.c.l.s4 1934713408
    %v512 = vunpack.c.0.s8 %v511
    %v513 = vperm.slane %v505, %v512
    %v514 = vrot.slane %v497, 4
    %v515 = vsel %vm298, 0.0, %v514
    %v516 = vrot.slane %v501, 4
    %v517 = vsel %vm298, 0.0, %v516
    %v518 = vrot.slane %v509, 4
    %v519 = vsel %vm298, 0.0, %v518
    %v520 = vrot.slane %v513, 4
    %v521 = vsel %vm298, 0.0, %v520
    %522 = vxpose.xlu0.b32.start [1/16] %v329, 128
    %523 = vxpose.xlu0.b32.cont [2/16] 0.0, 128
    %524 = vxpose.xlu0.b32.cont [3/16] 0.0, 128
    %525 = vxpose.xlu0.b32.cont [4/16] 0.0, 128
    %526 = vxpose.xlu0.b32.cont [5/16] 0.0, 128
    %527 = vxpose.xlu0.b32.cont [6/16] 0.0, 128
    %528 = vxpose.xlu0.b32.cont [7/16] 0.0, 128
    %529 = vxpose.xlu0.b32.cont [8/16] 0.0, 128
    %530 = vxpose.xlu0.b32.cont [9/16] 0.0, 128
    %531 = vxpose.xlu0.b32.cont [10/16] 0.0, 128
    %532 = vxpose.xlu0.b32.cont [11/16] 0.0, 128
    %533 = vxpose.xlu0.b32.cont [12/16] 0.0, 128
    %534 = vxpose.xlu0.b32.cont [13/16] 0.0, 128
    %535 = vxpose.xlu0.b32.cont [14/16] 0.0, 128
    %536 = vxpose.xlu0.b32.cont [15/16] 0.0, 128
    %537 = vxpose.xlu0.b32.end [16/16] 0.0, 128
    %v538 = vpop.trf.xlu0
    %v539 = vpop.trf.xlu0
    %v540 = vpop.trf.xlu0
    %v541 = vpop.trf.xlu0
    %v542 = vpop.trf.xlu0
    %v543 = vpop.trf.xlu0
    %v544 = vpop.trf.xlu0
    %v545 = vpop.trf.xlu0
    %v546 = vpop.trf.xlu0
    %v547 = vpop.trf.xlu0
    %v548 = vpop.trf.xlu0
    %v549 = vpop.trf.xlu0
    %v550 = vpop.trf.xlu0
    %v551 = vpop.trf.xlu0
    %v552 = vpop.trf.xlu0
    %v553 = vpop.trf.xlu0
    %554 = vxpose.xlu0.b32.start [1/16] %v347, 128
    %555 = vxpose.xlu0.b32.cont [2/16] 0.0, 128
    %556 = vxpose.xlu0.b32.cont [3/16] 0.0, 128
    %557 = vxpose.xlu0.b32.cont [4/16] 0.0, 128
    %558 = vxpose.xlu0.b32.cont [5/16] 0.0, 128
    %559 = vxpose.xlu0.b32.cont [6/16] 0.0, 128
    %560 = vxpose.xlu0.b32.cont [7/16] 0.0, 128
    %561 = vxpose.xlu0.b32.cont [8/16] 0.0, 128
    %562 = vxpose.xlu0.b32.cont [9/16] 0.0, 128
    %563 = vxpose.xlu0.b32.cont [10/16] 0.0, 128
    %564 = vxpose.xlu0.b32.cont [11/16] 0.0, 128
    %565 = vxpose.xlu0.b32.cont [12/16] 0.0, 128
    %566 = vxpose.xlu0.b32.cont [13/16] 0.0, 128
    %567 = vxpose.xlu0.b32.cont [14/16] 0.0, 128
    %568 = vxpose.xlu0.b32.cont [15/16] 0.0, 128
    %569 = vxpose.xlu0.b32.end [16/16] 0.0, 128
    %v570 = vpop.trf.xlu0
    %v571 = vpop.trf.xlu0
    %v572 = vpop.trf.xlu0
    %v573 = vpop.trf.xlu0
    %v574 = vpop.trf.xlu0
    %v575 = vpop.trf.xlu0
    %v576 = vpop.trf.xlu0
    %v577 = vpop.trf.xlu0
    %v578 = vpop.trf.xlu0
    %v579 = vpop.trf.xlu0
    %v580 = vpop.trf.xlu0
    %v581 = vpop.trf.xlu0
    %v582 = vpop.trf.xlu0
    %v583 = vpop.trf.xlu0
    %v584 = vpop.trf.xlu0
    %v585 = vpop.trf.xlu0
    %586 = vxpose.xlu0.b32.start [1/16] %v333, 128
    %587 = vxpose.xlu0.b32.cont [2/16] 0.0, 128
    %588 = vxpose.xlu0.b32.cont [3/16] 0.0, 128
    %589 = vxpose.xlu0.b32.cont [4/16] 0.0, 128
    %590 = vxpose.xlu0.b32.cont [5/16] 0.0, 128
    %591 = vxpose.xlu0.b32.cont [6/16] 0.0, 128
    %592 = vxpose.xlu0.b32.cont [7/16] 0.0, 128
    %593 = vxpose.xlu0.b32.cont [8/16] 0.0, 128
    %594 = vxpose.xlu0.b32.cont [9/16] 0.0, 128
    %595 = vxpose.xlu0.b32.cont [10/16] 0.0, 128
    %596 = vxpose.xlu0.b32.cont [11/16] 0.0, 128
    %597 = vxpose.xlu0.b32.cont [12/16] 0.0, 128
    %598 = vxpose.xlu0.b32.cont [13/16] 0.0, 128
    %599 = vxpose.xlu0.b32.cont [14/16] 0.0, 128
    %600 = vxpose.xlu0.b32.cont [15/16] 0.0, 128
    %601 = vxpose.xlu0.b32.end [16/16] 0.0, 128
    %v602 = vpop.trf.xlu0
    %v603 = vpop.trf.xlu0
    %v604 = vpop.trf.xlu0
    %v605 = vpop.trf.xlu0
    %v606 = vpop.trf.xlu0
    %v607 = vpop.trf.xlu0
    %v608 = vpop.trf.xlu0
    %v609 = vpop.trf.xlu0
    %v610 = vpop.trf.xlu0
    %v611 = vpop.trf.xlu0
    %v612 = vpop.trf.xlu0
    %v613 = vpop.trf.xlu0
    %v614 = vpop.trf.xlu0
    %v615 = vpop.trf.xlu0
    %v616 = vpop.trf.xlu0
    %v617 = vpop.trf.xlu0
    %618 = vxpose.xlu0.b32.start [1/16] %v349, 128
    %619 = vxpose.xlu0.b32.cont [2/16] 0.0, 128
    %620 = vxpose.xlu0.b32.cont [3/16] 0.0, 128
    %621 = vxpose.xlu0.b32.cont [4/16] 0.0, 128
    %622 = vxpose.xlu0.b32.cont [5/16] 0.0, 128
    %623 = vxpose.xlu0.b32.cont [6/16] 0.0, 128
    %624 = vxpose.xlu0.b32.cont [7/16] 0.0, 128
    %625 = vxpose.xlu0.b32.cont [8/16] 0.0, 128
    %626 = vxpose.xlu0.b32.cont [9/16] 0.0, 128
    %627 = vxpose.xlu0.b32.cont [10/16] 0.0, 128
    %628 = vxpose.xlu0.b32.cont [11/16] 0.0, 128
    %629 = vxpose.xlu0.b32.cont [12/16] 0.0, 128
    %630 = vxpose.xlu0.b32.cont [13/16] 0.0, 128
    %631 = vxpose.xlu0.b32.cont [14/16] 0.0, 128
    %632 = vxpose.xlu0.b32.cont [15/16] 0.0, 128
    %633 = vxpose.xlu0.b32.end [16/16] 0.0, 128
    %v634 = vpop.trf.xlu0
    %v635 = vpop.trf.xlu0
    %v636 = vpop.trf.xlu0
    %v637 = vpop.trf.xlu0
    %v638 = vpop.trf.xlu0
    %v639 = vpop.trf.xlu0
    %v640 = vpop.trf.xlu0
    %v641 = vpop.trf.xlu0
    %v642 = vpop.trf.xlu0
    %v643 = vpop.trf.xlu0
    %v644 = vpop.trf.xlu0
    %v645 = vpop.trf.xlu0
    %v646 = vpop.trf.xlu0
    %v647 = vpop.trf.xlu0
    %v648 = vpop.trf.xlu0
    %v649 = vpop.trf.xlu0
    %650 = vxpose.xlu0.b32.start [1/16] %v341, 128
    %651 = vxpose.xlu0.b32.cont [2/16] 0.0, 128
    %652 = vxpose.xlu0.b32.cont [3/16] 0.0, 128
    %653 = vxpose.xlu0.b32.cont [4/16] 0.0, 128
    %654 = vxpose.xlu0.b32.cont [5/16] 0.0, 128
    %655 = vxpose.xlu0.b32.cont [6/16] 0.0, 128
    %656 = vxpose.xlu0.b32.cont [7/16] 0.0, 128
    %657 = vxpose.xlu0.b32.cont [8/16] 0.0, 128
    %658 = vxpose.xlu0.b32.cont [9/16] 0.0, 128
    %659 = vxpose.xlu0.b32.cont [10/16] 0.0, 128
    %660 = vxpose.xlu0.b32.cont [11/16] 0.0, 128
    %661 = vxpose.xlu0.b32.cont [12/16] 0.0, 128
    %662 = vxpose.xlu0.b32.cont [13/16] 0.0, 128
    %663 = vxpose.xlu0.b32.cont [14/16] 0.0, 128
    %664 = vxpose.xlu0.b32.cont [15/16] 0.0, 128
    %665 = vxpose.xlu0.b32.end [16/16] 0.0, 128
    %v666 = vpop.trf.xlu0
    %v667 = vpop.trf.xlu0
    %v668 = vpop.trf.xlu0
    %v669 = vpop.trf.xlu0
    %v670 = vpop.trf.xlu0
    %v671 = vpop.trf.xlu0
    %v672 = vpop.trf.xlu0
    %v673 = vpop.trf.xlu0
    %v674 = vpop.trf.xlu0
    %v675 = vpop.trf.xlu0
    %v676 = vpop.trf.xlu0
    %v677 = vpop.trf.xlu0
    %v678 = vpop.trf.xlu0
    %v679 = vpop.trf.xlu0
    %v680 = vpop.trf.xlu0
    %v681 = vpop.trf.xlu0
    %682 = vxpose.xlu0.b32.start [1/16] %v351, 128
    %683 = vxpose.xlu0.b32.cont [2/16] 0.0, 128
    %684 = vxpose.xlu0.b32.cont [3/16] 0.0, 128
    %685 = vxpose.xlu0.b32.cont [4/16] 0.0, 128
    %686 = vxpose.xlu0.b32.cont [5/16] 0.0, 128
    %687 = vxpose.xlu0.b32.cont [6/16] 0.0, 128
    %688 = vxpose.xlu0.b32.cont [7/16] 0.0, 128
    %689 = vxpose.xlu0.b32.cont [8/16] 0.0, 128
    %690 = vxpose.xlu0.b32.cont [9/16] 0.0, 128
    %691 = vxpose.xlu0.b32.cont [10/16] 0.0, 128
    %692 = vxpose.xlu0.b32.cont [11/16] 0.0, 128
    %693 = vxpose.xlu0.b32.cont [12/16] 0.0, 128
    %694 = vxpose.xlu0.b32.cont [13/16] 0.0, 128
    %695 = vxpose.xlu0.b32.cont [14/16] 0.0, 128
    %696 = vxpose.xlu0.b32.cont [15/16] 0.0, 128
    %697 = vxpose.xlu0.b32.end [16/16] 0.0, 128
    %v698 = vpop.trf.xlu0
    %v699 = vpop.trf.xlu0
    %v700 = vpop.trf.xlu0
    %v701 = vpop.trf.xlu0
    %v702 = vpop.trf.xlu0
    %v703 = vpop.trf.xlu0
    %v704 = vpop.trf.xlu0
    %v705 = vpop.trf.xlu0
    %v706 = vpop.trf.xlu0
    %v707 = vpop.trf.xlu0
    %v708 = vpop.trf.xlu0
    %v709 = vpop.trf.xlu0
    %v710 = vpop.trf.xlu0
    %v711 = vpop.trf.xlu0
    %v712 = vpop.trf.xlu0
    %v713 = vpop.trf.xlu0
    %714 = vxpose.xlu0.b32.start [1/16] %v345, 128
    %715 = vxpose.xlu0.b32.cont [2/16] 0.0, 128
    %716 = vxpose.xlu0.b32.cont [3/16] 0.0, 128
    %717 = vxpose.xlu0.b32.cont [4/16] 0.0, 128
    %718 = vxpose.xlu0.b32.cont [5/16] 0.0, 128
    %719 = vxpose.xlu0.b32.cont [6/16] 0.0, 128
    %720 = vxpose.xlu0.b32.cont [7/16] 0.0, 128
    %721 = vxpose.xlu0.b32.cont [8/16] 0.0, 128
    %722 = vxpose.xlu0.b32.cont [9/16] 0.0, 128
    %723 = vxpose.xlu0.b32.cont [10/16] 0.0, 128
    %724 = vxpose.xlu0.b32.cont [11/16] 0.0, 128
    %725 = vxpose.xlu0.b32.cont [12/16] 0.0, 128
    %726 = vxpose.xlu0.b32.cont [13/16] 0.0, 128
    %727 = vxpose.xlu0.b32.cont [14/16] 0.0, 128
    %728 = vxpose.xlu0.b32.cont [15/16] 0.0, 128
    %729 = vxpose.xlu0.b32.end [16/16] 0.0, 128
    %v730 = vpop.trf.xlu0
    %v731 = vpop.trf.xlu0
    %v732 = vpop.trf.xlu0
    %v733 = vpop.trf.xlu0
    %v734 = vpop.trf.xlu0
    %v735 = vpop.trf.xlu0
    %v736 = vpop.trf.xlu0
    %v737 = vpop.trf.xlu0
    %v738 = vpop.trf.xlu0
    %v739 = vpop.trf.xlu0
    %v740 = vpop.trf.xlu0
    %v741 = vpop.trf.xlu0
    %v742 = vpop.trf.xlu0
    %v743 = vpop.trf.xlu0
    %v744 = vpop.trf.xlu0
    %v745 = vpop.trf.xlu0
    %746 = vxpose.xlu0.b32.start [1/16] %v353, 128
    %747 = vxpose.xlu0.b32.cont [2/16] 0.0, 128
    %748 = vxpose.xlu0.b32.cont [3/16] 0.0, 128
    %749 = vxpose.xlu0.b32.cont [4/16] 0.0, 128
    %750 = vxpose.xlu0.b32.cont [5/16] 0.0, 128
    %751 = vxpose.xlu0.b32.cont [6/16] 0.0, 128
    %752 = vxpose.xlu0.b32.cont [7/16] 0.0, 128
    %753 = vxpose.xlu0.b32.cont [8/16] 0.0, 128
    %754 = vxpose.xlu0.b32.cont [9/16] 0.0, 128
    %755 = vxpose.xlu0.b32.cont [10/16] 0.0, 128
    %756 = vxpose.xlu0.b32.cont [11/16] 0.0, 128
    %757 = vxpose.xlu0.b32.cont [12/16] 0.0, 128
    %758 = vxpose.xlu0.b32.cont [13/16] 0.0, 128
    %759 = vxpose.xlu0.b32.cont [14/16] 0.0, 128
    %760 = vxpose.xlu0.b32.cont [15/16] 0.0, 128
    %761 = vxpose.xlu0.b32.end [16/16] 0.0, 128
    %v762 = vpop.trf.xlu0
    %v763 = vpop.trf.xlu0
    %v764 = vpop.trf.xlu0
    %v765 = vpop.trf.xlu0
    %v766 = vpop.trf.xlu0
    %v767 = vpop.trf.xlu0
    %v768 = vpop.trf.xlu0
    %v769 = vpop.trf.xlu0
    %v770 = vpop.trf.xlu0
    %v771 = vpop.trf.xlu0
    %v772 = vpop.trf.xlu0
    %v773 = vpop.trf.xlu0
    %v774 = vpop.trf.xlu0
    %v775 = vpop.trf.xlu0
    %v776 = vpop.trf.xlu0
    %v777 = vpop.trf.xlu0
    %778 = vxpose.xlu0.b32.start [1/16] %v385, 128
    %779 = vxpose.xlu0.b32.cont [2/16] 0.0, 128
    %780 = vxpose.xlu0.b32.cont [3/16] 0.0, 128
    %781 = vxpose.xlu0.b32.cont [4/16] 0.0, 128
    %782 = vxpose.xlu0.b32.cont [5/16] 0.0, 128
    %783 = vxpose.xlu0.b32.cont [6/16] 0.0, 128
    %784 = vxpose.xlu0.b32.cont [7/16] 0.0, 128
    %785 = vxpose.xlu0.b32.cont [8/16] 0.0, 128
    %786 = vxpose.xlu0.b32.cont [9/16] 0.0, 128
    %787 = vxpose.xlu0.b32.cont [10/16] 0.0, 128
    %788 = vxpose.xlu0.b32.cont [11/16] 0.0, 128
    %789 = vxpose.xlu0.b32.cont [12/16] 0.0, 128
    %790 = vxpose.xlu0.b32.cont [13/16] 0.0, 128
    %791 = vxpose.xlu0.b32.cont [14/16] 0.0, 128
    %792 = vxpose.xlu0.b32.cont [15/16] 0.0, 128
    %793 = vxpose.xlu0.b32.end [16/16] 0.0, 128
    %v794 = vpop.trf.xlu0
    %v795 = vpop.trf.xlu0
    %v796 = vpop.trf.xlu0
    %v797 = vpop.trf.xlu0
    %v798 = vpop.trf.xlu0
    %v799 = vpop.trf.xlu0
    %v800 = vpop.trf.xlu0
    %v801 = vpop.trf.xlu0
    %v802 = vpop.trf.xlu0
    %v803 = vpop.trf.xlu0
    %v804 = vpop.trf.xlu0
    %v805 = vpop.trf.xlu0
    %v806 = vpop.trf.xlu0
    %v807 = vpop.trf.xlu0
    %v808 = vpop.trf.xlu0
    %v809 = vpop.trf.xlu0
    %810 = vxpose.xlu0.b32.start [1/16] %v403, 128
    %811 = vxpose.xlu0.b32.cont [2/16] 0.0, 128
    %812 = vxpose.xlu0.b32.cont [3/16] 0.0, 128
    %813 = vxpose.xlu0.b32.cont [4/16] 0.0, 128
    %814 = vxpose.xlu0.b32.cont [5/16] 0.0, 128
    %815 = vxpose.xlu0.b32.cont [6/16] 0.0, 128
    %816 = vxpose.xlu0.b32.cont [7/16] 0.0, 128
    %817 = vxpose.xlu0.b32.cont [8/16] 0.0, 128
    %818 = vxpose.xlu0.b32.cont [9/16] 0.0, 128
    %819 = vxpose.xlu0.b32.cont [10/16] 0.0, 128
    %820 = vxpose.xlu0.b32.cont [11/16] 0.0, 128
    %821 = vxpose.xlu0.b32.cont [12/16] 0.0, 128
    %822 = vxpose.xlu0.b32.cont [13/16] 0.0, 128
    %823 = vxpose.xlu0.b32.cont [14/16] 0.0, 128
    %824 = vxpose.xlu0.b32.cont [15/16] 0.0, 128
    %825 = vxpose.xlu0.b32.end [16/16] 0.0, 128
    %v826 = vpop.trf.xlu0
    %v827 = vpop.trf.xlu0
    %v828 = vpop.trf.xlu0
    %v829 = vpop.trf.xlu0
    %v830 = vpop.trf.xlu0
    %v831 = vpop.trf.xlu0
    %v832 = vpop.trf.xlu0
    %v833 = vpop.trf.xlu0
    %v834 = vpop.trf.xlu0
    %v835 = vpop.trf.xlu0
    %v836 = vpop.trf.xlu0
    %v837 = vpop.trf.xlu0
    %v838 = vpop.trf.xlu0
    %v839 = vpop.trf.xlu0
    %v840 = vpop.trf.xlu0
    %v841 = vpop.trf.xlu0
    %842 = vxpose.xlu0.b32.start [1/16] %v389, 128
    %843 = vxpose.xlu0.b32.cont [2/16] 0.0, 128
    %844 = vxpose.xlu0.b32.cont [3/16] 0.0, 128
    %845 = vxpose.xlu0.b32.cont [4/16] 0.0, 128
    %846 = vxpose.xlu0.b32.cont [5/16] 0.0, 128
    %847 = vxpose.xlu0.b32.cont [6/16] 0.0, 128
    %848 = vxpose.xlu0.b32.cont [7/16] 0.0, 128
    %849 = vxpose.xlu0.b32.cont [8/16] 0.0, 128
    %850 = vxpose.xlu0.b32.cont [9/16] 0.0, 128
    %851 = vxpose.xlu0.b32.cont [10/16] 0.0, 128
    %852 = vxpose.xlu0.b32.cont [11/16] 0.0, 128
    %853 = vxpose.xlu0.b32.cont [12/16] 0.0, 128
    %854 = vxpose.xlu0.b32.cont [13/16] 0.0, 128
    %855 = vxpose.xlu0.b32.cont [14/16] 0.0, 128
    %856 = vxpose.xlu0.b32.cont [15/16] 0.0, 128
    %857 = vxpose.xlu0.b32.end [16/16] 0.0, 128
    %v858 = vpop.trf.xlu0
    %v859 = vpop.trf.xlu0
    %v860 = vpop.trf.xlu0
    %v861 = vpop.trf.xlu0
    %v862 = vpop.trf.xlu0
    %v863 = vpop.trf.xlu0
    %v864 = vpop.trf.xlu0
    %v865 = vpop.trf.xlu0
    %v866 = vpop.trf.xlu0
    %v867 = vpop.trf.xlu0
    %v868 = vpop.trf.xlu0
    %v869 = vpop.trf.xlu0
    %v870 = vpop.trf.xlu0
    %v871 = vpop.trf.xlu0
    %v872 = vpop.trf.xlu0
    %v873 = vpop.trf.xlu0
    %874 = vxpose.xlu0.b32.start [1/16] %v405, 128
    %875 = vxpose.xlu0.b32.cont [2/16] 0.0, 128
    %876 = vxpose.xlu0.b32.cont [3/16] 0.0, 128
    %877 = vxpose.xlu0.b32.cont [4/16] 0.0, 128
    %878 = vxpose.xlu0.b32.cont [5/16] 0.0, 128
    %879 = vxpose.xlu0.b32.cont [6/16] 0.0, 128
    %880 = vxpose.xlu0.b32.cont [7/16] 0.0, 128
    %881 = vxpose.xlu0.b32.cont [8/16] 0.0, 128
    %882 = vxpose.xlu0.b32.cont [9/16] 0.0, 128
    %883 = vxpose.xlu0.b32.cont [10/16] 0.0, 128
    %884 = vxpose.xlu0.b32.cont [11/16] 0.0, 128
    %885 = vxpose.xlu0.b32.cont [12/16] 0.0, 128
    %886 = vxpose.xlu0.b32.cont [13/16] 0.0, 128
    %887 = vxpose.xlu0.b32.cont [14/16] 0.0, 128
    %888 = vxpose.xlu0.b32.cont [15/16] 0.0, 128
    %889 = vxpose.xlu0.b32.end [16/16] 0.0, 128
    %v890 = vpop.trf.xlu0
    %v891 = vpop.trf.xlu0
    %v892 = vpop.trf.xlu0
    %v893 = vpop.trf.xlu0
    %v894 = vpop.trf.xlu0
    %v895 = vpop.trf.xlu0
    %v896 = vpop.trf.xlu0
    %v897 = vpop.trf.xlu0
    %v898 = vpop.trf.xlu0
    %v899 = vpop.trf.xlu0
    %v900 = vpop.trf.xlu0
    %v901 = vpop.trf.xlu0
    %v902 = vpop.trf.xlu0
    %v903 = vpop.trf.xlu0
    %v904 = vpop.trf.xlu0
    %v905 = vpop.trf.xlu0
    %906 = vxpose.xlu0.b32.start [1/16] %v397, 128
    %907 = vxpose.xlu0.b32.cont [2/16] 0.0, 128
    %908 = vxpose.xlu0.b32.cont [3/16] 0.0, 128
    %909 = vxpose.xlu0.b32.cont [4/16] 0.0, 128
    %910 = vxpose.xlu0.b32.cont [5/16] 0.0, 128
    %911 = vxpose.xlu0.b32.cont [6/16] 0.0, 128
    %912 = vxpose.xlu0.b32.cont [7/16] 0.0, 128
    %913 = vxpose.xlu0.b32.cont [8/16] 0.0, 128
    %914 = vxpose.xlu0.b32.cont [9/16] 0.0, 128
    %915 = vxpose.xlu0.b32.cont [10/16] 0.0, 128
    %916 = vxpose.xlu0.b32.cont [11/16] 0.0, 128
    %917 = vxpose.xlu0.b32.cont [12/16] 0.0, 128
    %918 = vxpose.xlu0.b32.cont [13/16] 0.0, 128
    %919 = vxpose.xlu0.b32.cont [14/16] 0.0, 128
    %920 = vxpose.xlu0.b32.cont [15/16] 0.0, 128
    %921 = vxpose.xlu0.b32.end [16/16] 0.0, 128
    %v922 = vpop.trf.xlu0
    %v923 = vpop.trf.xlu0
    %v924 = vpop.trf.xlu0
    %v925 = vpop.trf.xlu0
    %v926 = vpop.trf.xlu0
    %v927 = vpop.trf.xlu0
    %v928 = vpop.trf.xlu0
    %v929 = vpop.trf.xlu0
    %v930 = vpop.trf.xlu0
    %v931 = vpop.trf.xlu0
    %v932 = vpop.trf.xlu0
    %v933 = vpop.trf.xlu0
    %v934 = vpop.trf.xlu0
    %v935 = vpop.trf.xlu0
    %v936 = vpop.trf.xlu0
    %v937 = vpop.trf.xlu0
    %938 = vxpose.xlu0.b32.start [1/16] %v407, 128
    %939 = vxpose.xlu0.b32.cont [2/16] 0.0, 128
    %940 = vxpose.xlu0.b32.cont [3/16] 0.0, 128
    %941 = vxpose.xlu0.b32.cont [4/16] 0.0, 128
    %942 = vxpose.xlu0.b32.cont [5/16] 0.0, 128
    %943 = vxpose.xlu0.b32.cont [6/16] 0.0, 128
    %944 = vxpose.xlu0.b32.cont [7/16] 0.0, 128
    %945 = vxpose.xlu0.b32.cont [8/16] 0.0, 128
    %946 = vxpose.xlu0.b32.cont [9/16] 0.0, 128
    %947 = vxpose.xlu0.b32.cont [10/16] 0.0, 128
    %948 = vxpose.xlu0.b32.cont [11/16] 0.0, 128
    %949 = vxpose.xlu0.b32.cont [12/16] 0.0, 128
    %950 = vxpose.xlu0.b32.cont [13/16] 0.0, 128
    %951 = vxpose.xlu0.b32.cont [14/16] 0.0, 128
    %952 = vxpose.xlu0.b32.cont [15/16] 0.0, 128
    %953 = vxpose.xlu0.b32.end [16/16] 0.0, 128
    %v954 = vpop.trf.xlu0
    %v955 = vpop.trf.xlu0
    %v956 = vpop.trf.xlu0
    %v957 = vpop.trf.xlu0
    %v958 = vpop.trf.xlu0
    %v959 = vpop.trf.xlu0
    %v960 = vpop.trf.xlu0
    %v961 = vpop.trf.xlu0
    %v962 = vpop.trf.xlu0
    %v963 = vpop.trf.xlu0
    %v964 = vpop.trf.xlu0
    %v965 = vpop.trf.xlu0
    %v966 = vpop.trf.xlu0
    %v967 = vpop.trf.xlu0
    %v968 = vpop.trf.xlu0
    %v969 = vpop.trf.xlu0
    %970 = vxpose.xlu0.b32.start [1/16] %v401, 128
    %971 = vxpose.xlu0.b32.cont [2/16] 0.0, 128
    %972 = vxpose.xlu0.b32.cont [3/16] 0.0, 128
    %973 = vxpose.xlu0.b32.cont [4/16] 0.0, 128
    %974 = vxpose.xlu0.b32.cont [5/16] 0.0, 128
    %975 = vxpose.xlu0.b32.cont [6/16] 0.0, 128
    %976 = vxpose.xlu0.b32.cont [7/16] 0.0, 128
    %977 = vxpose.xlu0.b32.cont [8/16] 0.0, 128
    %978 = vxpose.xlu0.b32.cont [9/16] 0.0, 128
    %979 = vxpose.xlu0.b32.cont [10/16] 0.0, 128
    %980 = vxpose.xlu0.b32.cont [11/16] 0.0, 128
    %981 = vxpose.xlu0.b32.cont [12/16] 0.0, 128
    %982 = vxpose.xlu0.b32.cont [13/16] 0.0, 128
    %983 = vxpose.xlu0.b32.cont [14/16] 0.0, 128
    %984 = vxpose.xlu0.b32.cont [15/16] 0.0, 128
    %985 = vxpose.xlu0.b32.end [16/16] 0.0, 128
    %v986 = vpop.trf.xlu0
    %v987 = vpop.trf.xlu0
    %v988 = vpop.trf.xlu0
    %v989 = vpop.trf.xlu0
    %v990 = vpop.trf.xlu0
    %v991 = vpop.trf.xlu0
    %v992 = vpop.trf.xlu0
    %v993 = vpop.trf.xlu0
    %v994 = vpop.trf.xlu0
    %v995 = vpop.trf.xlu0
    %v996 = vpop.trf.xlu0
    %v997 = vpop.trf.xlu0
    %v998 = vpop.trf.xlu0
    %v999 = vpop.trf.xlu0
    %v1000 = vpop.trf.xlu0
    %v1001 = vpop.trf.xlu0
    %1002 = vxpose.xlu0.b32.start [1/16] %v409, 128
    %1003 = vxpose.xlu0.b32.cont [2/16] 0.0, 128
    %1004 = vxpose.xlu0.b32.cont [3/16] 0.0, 128
    %1005 = vxpose.xlu0.b32.cont [4/16] 0.0, 128
    %1006 = vxpose.xlu0.b32.cont [5/16] 0.0, 128
    %1007 = vxpose.xlu0.b32.cont [6/16] 0.0, 128
    %1008 = vxpose.xlu0.b32.cont [7/16] 0.0, 128
    %1009 = vxpose.xlu0.b32.cont [8/16] 0.0, 128
    %1010 = vxpose.xlu0.b32.cont [9/16] 0.0, 128
    %1011 = vxpose.xlu0.b32.cont [10/16] 0.0, 128
    %1012 = vxpose.xlu0.b32.cont [11/16] 0.0, 128
    %1013 = vxpose.xlu0.b32.cont [12/16] 0.0, 128
    %1014 = vxpose.xlu0.b32.cont [13/16] 0.0, 128
    %1015 = vxpose.xlu0.b32.cont [14/16] 0.0, 128
    %1016 = vxpose.xlu0.b32.cont [15/16] 0.0, 128
    %1017 = vxpose.xlu0.b32.end [16/16] 0.0, 128
    %v1018 = vpop.trf.xlu0
    %v1019 = vpop.trf.xlu0
    %v1020 = vpop.trf.xlu0
    %v1021 = vpop.trf.xlu0
    %v1022 = vpop.trf.xlu0
    %v1023 = vpop.trf.xlu0
    %v1024 = vpop.trf.xlu0
    %v1025 = vpop.trf.xlu0
    %v1026 = vpop.trf.xlu0
    %v1027 = vpop.trf.xlu0
    %v1028 = vpop.trf.xlu0
    %v1029 = vpop.trf.xlu0
    %v1030 = vpop.trf.xlu0
    %v1031 = vpop.trf.xlu0
    %v1032 = vpop.trf.xlu0
    %v1033 = vpop.trf.xlu0
    %1034 = vxpose.xlu0.b32.start [1/16] %v441, 128
    %1035 = vxpose.xlu0.b32.cont [2/16] 0.0, 128
    %1036 = vxpose.xlu0.b32.cont [3/16] 0.0, 128
    %1037 = vxpose.xlu0.b32.cont [4/16] 0.0, 128
    %1038 = vxpose.xlu0.b32.cont [5/16] 0.0, 128
    %1039 = vxpose.xlu0.b32.cont [6/16] 0.0, 128
    %1040 = vxpose.xlu0.b32.cont [7/16] 0.0, 128
    %1041 = vxpose.xlu0.b32.cont [8/16] 0.0, 128
    %1042 = vxpose.xlu0.b32.cont [9/16] 0.0, 128
    %1043 = vxpose.xlu0.b32.cont [10/16] 0.0, 128
    %1044 = vxpose.xlu0.b32.cont [11/16] 0.0, 128
    %1045 = vxpose.xlu0.b32.cont [12/16] 0.0, 128
    %1046 = vxpose.xlu0.b32.cont [13/16] 0.0, 128
    %1047 = vxpose.xlu0.b32.cont [14/16] 0.0, 128
    %1048 = vxpose.xlu0.b32.cont [15/16] 0.0, 128
    %1049 = vxpose.xlu0.b32.end [16/16] 0.0, 128
    %v1050 = vpop.trf.xlu0
    %v1051 = vpop.trf.xlu0
    %v1052 = vpop.trf.xlu0
    %v1053 = vpop.trf.xlu0
    %v1054 = vpop.trf.xlu0
    %v1055 = vpop.trf.xlu0
    %v1056 = vpop.trf.xlu0
    %v1057 = vpop.trf.xlu0
    %v1058 = vpop.trf.xlu0
    %v1059 = vpop.trf.xlu0
    %v1060 = vpop.trf.xlu0
    %v1061 = vpop.trf.xlu0
    %v1062 = vpop.trf.xlu0
    %v1063 = vpop.trf.xlu0
    %v1064 = vpop.trf.xlu0
    %v1065 = vpop.trf.xlu0
    %1066 = vxpose.xlu0.b32.start [1/16] %v459, 128
    %1067 = vxpose.xlu0.b32.cont [2/16] 0.0, 128
    %1068 = vxpose.xlu0.b32.cont [3/16] 0.0, 128
    %1069 = vxpose.xlu0.b32.cont [4/16] 0.0, 128
    %1070 = vxpose.xlu0.b32.cont [5/16] 0.0, 128
    %1071 = vxpose.xlu0.b32.cont [6/16] 0.0, 128
    %1072 = vxpose.xlu0.b32.cont [7/16] 0.0, 128
    %1073 = vxpose.xlu0.b32.cont [8/16] 0.0, 128
    %1074 = vxpose.xlu0.b32.cont [9/16] 0.0, 128
    %1075 = vxpose.xlu0.b32.cont [10/16] 0.0, 128
    %1076 = vxpose.xlu0.b32.cont [11/16] 0.0, 128
    %1077 = vxpose.xlu0.b32.cont [12/16] 0.0, 128
    %1078 = vxpose.xlu0.b32.cont [13/16] 0.0, 128
    %1079 = vxpose.xlu0.b32.cont [14/16] 0.0, 128
    %1080 = vxpose.xlu0.b32.cont [15/16] 0.0, 128
    %1081 = vxpose.xlu0.b32.end [16/16] 0.0, 128
    %v1082 = vpop.trf.xlu0
    %v1083 = vpop.trf.xlu0
    %v1084 = vpop.trf.xlu0
    %v1085 = vpop.trf.xlu0
    %v1086 = vpop.trf.xlu0
    %v1087 = vpop.trf.xlu0
    %v1088 = vpop.trf.xlu0
    %v1089 = vpop.trf.xlu0
    %v1090 = vpop.trf.xlu0
    %v1091 = vpop.trf.xlu0
    %v1092 = vpop.trf.xlu0
    %v1093 = vpop.trf.xlu0
    %v1094 = vpop.trf.xlu0
    %v1095 = vpop.trf.xlu0
    %v1096 = vpop.trf.xlu0
    %v1097 = vpop.trf.xlu0
    %1098 = vxpose.xlu0.b32.start [1/16] %v445, 128
    %1099 = vxpose.xlu0.b32.cont [2/16] 0.0, 128
    %1100 = vxpose.xlu0.b32.cont [3/16] 0.0, 128
    %1101 = vxpose.xlu0.b32.cont [4/16] 0.0, 128
    %1102 = vxpose.xlu0.b32.cont [5/16] 0.0, 128
    %1103 = vxpose.xlu0.b32.cont [6/16] 0.0, 128
    %1104 = vxpose.xlu0.b32.cont [7/16] 0.0, 128
    %1105 = vxpose.xlu0.b32.cont [8/16] 0.0, 128
    %1106 = vxpose.xlu0.b32.cont [9/16] 0.0, 128
    %1107 = vxpose.xlu0.b32.cont [10/16] 0.0, 128
    %1108 = vxpose.xlu0.b32.cont [11/16] 0.0, 128
    %1109 = vxpose.xlu0.b32.cont [12/16] 0.0, 128
    %1110 = vxpose.xlu0.b32.cont [13/16] 0.0, 128
    %1111 = vxpose.xlu0.b32.cont [14/16] 0.0, 128
    %1112 = vxpose.xlu0.b32.cont [15/16] 0.0, 128
    %1113 = vxpose.xlu0.b32.end [16/16] 0.0, 128
    %v1114 = vpop.trf.xlu0
    %v1115 = vpop.trf.xlu0
    %v1116 = vpop.trf.xlu0
    %v1117 = vpop.trf.xlu0
    %v1118 = vpop.trf.xlu0
    %v1119 = vpop.trf.xlu0
    %v1120 = vpop.trf.xlu0
    %v1121 = vpop.trf.xlu0
    %v1122 = vpop.trf.xlu0
    %v1123 = vpop.trf.xlu0
    %v1124 = vpop.trf.xlu0
    %v1125 = vpop.trf.xlu0
    %v1126 = vpop.trf.xlu0
    %v1127 = vpop.trf.xlu0
    %v1128 = vpop.trf.xlu0
    %v1129 = vpop.trf.xlu0
    %1130 = vxpose.xlu0.b32.start [1/16] %v461, 128
    %1131 = vxpose.xlu0.b32.cont [2/16] 0.0, 128
    %1132 = vxpose.xlu0.b32.cont [3/16] 0.0, 128
    %1133 = vxpose.xlu0.b32.cont [4/16] 0.0, 128
    %1134 = vxpose.xlu0.b32.cont [5/16] 0.0, 128
    %1135 = vxpose.xlu0.b32.cont [6/16] 0.0, 128
    %1136 = vxpose.xlu0.b32.cont [7/16] 0.0, 128
    %1137 = vxpose.xlu0.b32.cont [8/16] 0.0, 128
    %1138 = vxpose.xlu0.b32.cont [9/16] 0.0, 128
    %1139 = vxpose.xlu0.b32.cont [10/16] 0.0, 128
    %1140 = vxpose.xlu0.b32.cont [11/16] 0.0, 128
    %1141 = vxpose.xlu0.b32.cont [12/16] 0.0, 128
    %1142 = vxpose.xlu0.b32.cont [13/16] 0.0, 128
    %1143 = vxpose.xlu0.b32.cont [14/16] 0.0, 128
    %1144 = vxpose.xlu0.b32.cont [15/16] 0.0, 128
    %1145 = vxpose.xlu0.b32.end [16/16] 0.0, 128
    %v1146 = vpop.trf.xlu0
    %v1147 = vpop.trf.xlu0
    %v1148 = vpop.trf.xlu0
    %v1149 = vpop.trf.xlu0
    %v1150 = vpop.trf.xlu0
    %v1151 = vpop.trf.xlu0
    %v1152 = vpop.trf.xlu0
    %v1153 = vpop.trf.xlu0
    %v1154 = vpop.trf.xlu0
    %v1155 = vpop.trf.xlu0
    %v1156 = vpop.trf.xlu0
    %v1157 = vpop.trf.xlu0
    %v1158 = vpop.trf.xlu0
    %v1159 = vpop.trf.xlu0
    %v1160 = vpop.trf.xlu0
    %v1161 = vpop.trf.xlu0
    %1162 = vxpose.xlu0.b32.start [1/16] %v453, 128
    %1163 = vxpose.xlu0.b32.cont [2/16] 0.0, 128
    %1164 = vxpose.xlu0.b32.cont [3/16] 0.0, 128
    %1165 = vxpose.xlu0.b32.cont [4/16] 0.0, 128
    %1166 = vxpose.xlu0.b32.cont [5/16] 0.0, 128
    %1167 = vxpose.xlu0.b32.cont [6/16] 0.0, 128
    %1168 = vxpose.xlu0.b32.cont [7/16] 0.0, 128
    %1169 = vxpose.xlu0.b32.cont [8/16] 0.0, 128
    %1170 = vxpose.xlu0.b32.cont [9/16] 0.0, 128
    %1171 = vxpose.xlu0.b32.cont [10/16] 0.0, 128
    %1172 = vxpose.xlu0.b32.cont [11/16] 0.0, 128
    %1173 = vxpose.xlu0.b32.cont [12/16] 0.0, 128
    %1174 = vxpose.xlu0.b32.cont [13/16] 0.0, 128
    %1175 = vxpose.xlu0.b32.cont [14/16] 0.0, 128
    %1176 = vxpose.xlu0.b32.cont [15/16] 0.0, 128
    %1177 = vxpose.xlu0.b32.end [16/16] 0.0, 128
    %v1178 = vpop.trf.xlu0
    %v1179 = vpop.trf.xlu0
    %v1180 = vpop.trf.xlu0
    %v1181 = vpop.trf.xlu0
    %v1182 = vpop.trf.xlu0
    %v1183 = vpop.trf.xlu0
    %v1184 = vpop.trf.xlu0
    %v1185 = vpop.trf.xlu0
    %v1186 = vpop.trf.xlu0
    %v1187 = vpop.trf.xlu0
    %v1188 = vpop.trf.xlu0
    %v1189 = vpop.trf.xlu0
    %v1190 = vpop.trf.xlu0
    %v1191 = vpop.trf.xlu0
    %v1192 = vpop.trf.xlu0
    %v1193 = vpop.trf.xlu0
    %1194 = vxpose.xlu0.b32.start [1/16] %v463, 128
    %1195 = vxpose.xlu0.b32.cont [2/16] 0.0, 128
    %1196 = vxpose.xlu0.b32.cont [3/16] 0.0, 128
    %1197 = vxpose.xlu0.b32.cont [4/16] 0.0, 128
    %1198 = vxpose.xlu0.b32.cont [5/16] 0.0, 128
    %1199 = vxpose.xlu0.b32.cont [6/16] 0.0, 128
    %1200 = vxpose.xlu0.b32.cont [7/16] 0.0, 128
    %1201 = vxpose.xlu0.b32.cont [8/16] 0.0, 128
    %1202 = vxpose.xlu0.b32.cont [9/16] 0.0, 128
    %1203 = vxpose.xlu0.b32.cont [10/16] 0.0, 128
    %1204 = vxpose.xlu0.b32.cont [11/16] 0.0, 128
    %1205 = vxpose.xlu0.b32.cont [12/16] 0.0, 128
    %1206 = vxpose.xlu0.b32.cont [13/16] 0.0, 128
    %1207 = vxpose.xlu0.b32.cont [14/16] 0.0, 128
    %1208 = vxpose.xlu0.b32.cont [15/16] 0.0, 128
    %1209 = vxpose.xlu0.b32.end [16/16] 0.0, 128
    %v1210 = vpop.trf.xlu0
    %v1211 = vpop.trf.xlu0
    %v1212 = vpop.trf.xlu0
    %v1213 = vpop.trf.xlu0
    %v1214 = vpop.trf.xlu0
    %v1215 = vpop.trf.xlu0
    %v1216 = vpop.trf.xlu0
    %v1217 = vpop.trf.xlu0
    %v1218 = vpop.trf.xlu0
    %v1219 = vpop.trf.xlu0
    %v1220 = vpop.trf.xlu0
    %v1221 = vpop.trf.xlu0
    %v1222 = vpop.trf.xlu0
    %v1223 = vpop.trf.xlu0
    %v1224 = vpop.trf.xlu0
    %v1225 = vpop.trf.xlu0
    %1226 = vxpose.xlu0.b32.start [1/16] %v457, 128
    %1227 = vxpose.xlu0.b32.cont [2/16] 0.0, 128
    %1228 = vxpose.xlu0.b32.cont [3/16] 0.0, 128
    %1229 = vxpose.xlu0.b32.cont [4/16] 0.0, 128
    %1230 = vxpose.xlu0.b32.cont [5/16] 0.0, 128
    %1231 = vxpose.xlu0.b32.cont [6/16] 0.0, 128
    %1232 = vxpose.xlu0.b32.cont [7/16] 0.0, 128
    %1233 = vxpose.xlu0.b32.cont [8/16] 0.0, 128
    %1234 = vxpose.xlu0.b32.cont [9/16] 0.0, 128
    %1235 = vxpose.xlu0.b32.cont [10/16] 0.0, 128
    %1236 = vxpose.xlu0.b32.cont [11/16] 0.0, 128
    %1237 = vxpose.xlu0.b32.cont [12/16] 0.0, 128
    %1238 = vxpose.xlu0.b32.cont [13/16] 0.0, 128
    %1239 = vxpose.xlu0.b32.cont [14/16] 0.0, 128
    %1240 = vxpose.xlu0.b32.cont [15/16] 0.0, 128
    %1241 = vxpose.xlu0.b32.end [16/16] 0.0, 128
    %v1242 = vpop.trf.xlu0
    %v1243 = vpop.trf.xlu0
    %v1244 = vpop.trf.xlu0
    %v1245 = vpop.trf.xlu0
    %v1246 = vpop.trf.xlu0
    %v1247 = vpop.trf.xlu0
    %v1248 = vpop.trf.xlu0
    %v1249 = vpop.trf.xlu0
    %v1250 = vpop.trf.xlu0
    %v1251 = vpop.trf.xlu0
    %v1252 = vpop.trf.xlu0
    %v1253 = vpop.trf.xlu0
    %v1254 = vpop.trf.xlu0
    %v1255 = vpop.trf.xlu0
    %v1256 = vpop.trf.xlu0
    %v1257 = vpop.trf.xlu0
    %1258 = vxpose.xlu0.b32.start [1/16] %v465, 128
    %1259 = vxpose.xlu0.b32.cont [2/16] 0.0, 128
    %1260 = vxpose.xlu0.b32.cont [3/16] 0.0, 128
    %1261 = vxpose.xlu0.b32.cont [4/16] 0.0, 128
    %1262 = vxpose.xlu0.b32.cont [5/16] 0.0, 128
    %1263 = vxpose.xlu0.b32.cont [6/16] 0.0, 128
    %1264 = vxpose.xlu0.b32.cont [7/16] 0.0, 128
    %1265 = vxpose.xlu0.b32.cont [8/16] 0.0, 128
    %1266 = vxpose.xlu0.b32.cont [9/16] 0.0, 128
    %1267 = vxpose.xlu0.b32.cont [10/16] 0.0, 128
    %1268 = vxpose.xlu0.b32.cont [11/16] 0.0, 128
    %1269 = vxpose.xlu0.b32.cont [12/16] 0.0, 128
    %1270 = vxpose.xlu0.b32.cont [13/16] 0.0, 128
    %1271 = vxpose.xlu0.b32.cont [14/16] 0.0, 128
    %1272 = vxpose.xlu0.b32.cont [15/16] 0.0, 128
    %1273 = vxpose.xlu0.b32.end [16/16] 0.0, 128
    %v1274 = vpop.trf.xlu0
    %v1275 = vpop.trf.xlu0
    %v1276 = vpop.trf.xlu0
    %v1277 = vpop.trf.xlu0
    %v1278 = vpop.trf.xlu0
    %v1279 = vpop.trf.xlu0
    %v1280 = vpop.trf.xlu0
    %v1281 = vpop.trf.xlu0
    %v1282 = vpop.trf.xlu0
    %v1283 = vpop.trf.xlu0
    %v1284 = vpop.trf.xlu0
    %v1285 = vpop.trf.xlu0
    %v1286 = vpop.trf.xlu0
    %v1287 = vpop.trf.xlu0
    %v1288 = vpop.trf.xlu0
    %v1289 = vpop.trf.xlu0
    %1290 = vxpose.xlu0.b32.start [1/16] %v497, 128
    %1291 = vxpose.xlu0.b32.cont [2/16] 0.0, 128
    %1292 = vxpose.xlu0.b32.cont [3/16] 0.0, 128
    %1293 = vxpose.xlu0.b32.cont [4/16] 0.0, 128
    %1294 = vxpose.xlu0.b32.cont [5/16] 0.0, 128
    %1295 = vxpose.xlu0.b32.cont [6/16] 0.0, 128
    %1296 = vxpose.xlu0.b32.cont [7/16] 0.0, 128
    %1297 = vxpose.xlu0.b32.cont [8/16] 0.0, 128
    %1298 = vxpose.xlu0.b32.cont [9/16] 0.0, 128
    %1299 = vxpose.xlu0.b32.cont [10/16] 0.0, 128
    %1300 = vxpose.xlu0.b32.cont [11/16] 0.0, 128
    %1301 = vxpose.xlu0.b32.cont [12/16] 0.0, 128
    %1302 = vxpose.xlu0.b32.cont [13/16] 0.0, 128
    %1303 = vxpose.xlu0.b32.cont [14/16] 0.0, 128
    %1304 = vxpose.xlu0.b32.cont [15/16] 0.0, 128
    %1305 = vxpose.xlu0.b32.end [16/16] 0.0, 128
    %v1306 = vpop.trf.xlu0
    %v1307 = vpop.trf.xlu0
    %v1308 = vpop.trf.xlu0
    %v1309 = vpop.trf.xlu0
    %v1310 = vpop.trf.xlu0
    %v1311 = vpop.trf.xlu0
    %v1312 = vpop.trf.xlu0
    %v1313 = vpop.trf.xlu0
    %v1314 = vpop.trf.xlu0
    %v1315 = vpop.trf.xlu0
    %v1316 = vpop.trf.xlu0
    %v1317 = vpop.trf.xlu0
    %v1318 = vpop.trf.xlu0
    %v1319 = vpop.trf.xlu0
    %v1320 = vpop.trf.xlu0
    %v1321 = vpop.trf.xlu0
    %1322 = vxpose.xlu0.b32.start [1/16] %v515, 128
    %1323 = vxpose.xlu0.b32.cont [2/16] 0.0, 128
    %1324 = vxpose.xlu0.b32.cont [3/16] 0.0, 128
    %1325 = vxpose.xlu0.b32.cont [4/16] 0.0, 128
    %1326 = vxpose.xlu0.b32.cont [5/16] 0.0, 128
    %1327 = vxpose.xlu0.b32.cont [6/16] 0.0, 128
    %1328 = vxpose.xlu0.b32.cont [7/16] 0.0, 128
    %1329 = vxpose.xlu0.b32.cont [8/16] 0.0, 128
    %1330 = vxpose.xlu0.b32.cont [9/16] 0.0, 128
    %1331 = vxpose.xlu0.b32.cont [10/16] 0.0, 128
    %1332 = vxpose.xlu0.b32.cont [11/16] 0.0, 128
    %1333 = vxpose.xlu0.b32.cont [12/16] 0.0, 128
    %1334 = vxpose.xlu0.b32.cont [13/16] 0.0, 128
    %1335 = vxpose.xlu0.b32.cont [14/16] 0.0, 128
    %1336 = vxpose.xlu0.b32.cont [15/16] 0.0, 128
    %1337 = vxpose.xlu0.b32.end [16/16] 0.0, 128
    %v1338 = vpop.trf.xlu0
    %v1339 = vpop.trf.xlu0
    %v1340 = vpop.trf.xlu0
    %v1341 = vpop.trf.xlu0
    %v1342 = vpop.trf.xlu0
    %v1343 = vpop.trf.xlu0
    %v1344 = vpop.trf.xlu0
    %v1345 = vpop.trf.xlu0
    %v1346 = vpop.trf.xlu0
    %v1347 = vpop.trf.xlu0
    %v1348 = vpop.trf.xlu0
    %v1349 = vpop.trf.xlu0
    %v1350 = vpop.trf.xlu0
    %v1351 = vpop.trf.xlu0
    %v1352 = vpop.trf.xlu0
    %v1353 = vpop.trf.xlu0
    %1354 = vxpose.xlu0.b32.start [1/16] %v501, 128
    %1355 = vxpose.xlu0.b32.cont [2/16] 0.0, 128
    %1356 = vxpose.xlu0.b32.cont [3/16] 0.0, 128
    %1357 = vxpose.xlu0.b32.cont [4/16] 0.0, 128
    %1358 = vxpose.xlu0.b32.cont [5/16] 0.0, 128
    %1359 = vxpose.xlu0.b32.cont [6/16] 0.0, 128
    %1360 = vxpose.xlu0.b32.cont [7/16] 0.0, 128
    %1361 = vxpose.xlu0.b32.cont [8/16] 0.0, 128
    %1362 = vxpose.xlu0.b32.cont [9/16] 0.0, 128
    %1363 = vxpose.xlu0.b32.cont [10/16] 0.0, 128
    %1364 = vxpose.xlu0.b32.cont [11/16] 0.0, 128
    %1365 = vxpose.xlu0.b32.cont [12/16] 0.0, 128
    %1366 = vxpose.xlu0.b32.cont [13/16] 0.0, 128
    %1367 = vxpose.xlu0.b32.cont [14/16] 0.0, 128
    %1368 = vxpose.xlu0.b32.cont [15/16] 0.0, 128
    %1369 = vxpose.xlu0.b32.end [16/16] 0.0, 128
    %v1370 = vpop.trf.xlu0
    %v1371 = vpop.trf.xlu0
    %v1372 = vpop.trf.xlu0
    %v1373 = vpop.trf.xlu0
    %v1374 = vpop.trf.xlu0
    %v1375 = vpop.trf.xlu0
    %v1376 = vpop.trf.xlu0
    %v1377 = vpop.trf.xlu0
    %v1378 = vpop.trf.xlu0
    %v1379 = vpop.trf.xlu0
    %v1380 = vpop.trf.xlu0
    %v1381 = vpop.trf.xlu0
    %v1382 = vpop.trf.xlu0
    %v1383 = vpop.trf.xlu0
    %v1384 = vpop.trf.xlu0
    %v1385 = vpop.trf.xlu0
    %1386 = vxpose.xlu0.b32.start [1/16] %v517, 128
    %1387 = vxpose.xlu0.b32.cont [2/16] 0.0, 128
    %1388 = vxpose.xlu0.b32.cont [3/16] 0.0, 128
    %1389 = vxpose.xlu0.b32.cont [4/16] 0.0, 128
    %1390 = vxpose.xlu0.b32.cont [5/16] 0.0, 128
    %1391 = vxpose.xlu0.b32.cont [6/16] 0.0, 128
    %1392 = vxpose.xlu0.b32.cont [7/16] 0.0, 128
    %1393 = vxpose.xlu0.b32.cont [8/16] 0.0, 128
    %1394 = vxpose.xlu0.b32.cont [9/16] 0.0, 128
    %1395 = vxpose.xlu0.b32.cont [10/16] 0.0, 128
    %1396 = vxpose.xlu0.b32.cont [11/16] 0.0, 128
    %1397 = vxpose.xlu0.b32.cont [12/16] 0.0, 128
    %1398 = vxpose.xlu0.b32.cont [13/16] 0.0, 128
    %1399 = vxpose.xlu0.b32.cont [14/16] 0.0, 128
    %1400 = vxpose.xlu0.b32.cont [15/16] 0.0, 128
    %1401 = vxpose.xlu0.b32.end [16/16] 0.0, 128
    %v1402 = vpop.trf.xlu0
    %v1403 = vpop.trf.xlu0
    %v1404 = vpop.trf.xlu0
    %v1405 = vpop.trf.xlu0
    %v1406 = vpop.trf.xlu0
    %v1407 = vpop.trf.xlu0
    %v1408 = vpop.trf.xlu0
    %v1409 = vpop.trf.xlu0
    %v1410 = vpop.trf.xlu0
    %v1411 = vpop.trf.xlu0
    %v1412 = vpop.trf.xlu0
    %v1413 = vpop.trf.xlu0
    %v1414 = vpop.trf.xlu0
    %v1415 = vpop.trf.xlu0
    %v1416 = vpop.trf.xlu0
    %v1417 = vpop.trf.xlu0
    %1418 = vxpose.xlu0.b32.start [1/16] %v509, 128
    %1419 = vxpose.xlu0.b32.cont [2/16] 0.0, 128
    %1420 = vxpose.xlu0.b32.cont [3/16] 0.0, 128
    %1421 = vxpose.xlu0.b32.cont [4/16] 0.0, 128
    %1422 = vxpose.xlu0.b32.cont [5/16] 0.0, 128
    %1423 = vxpose.xlu0.b32.cont [6/16] 0.0, 128
    %1424 = vxpose.xlu0.b32.cont [7/16] 0.0, 128
    %1425 = vxpose.xlu0.b32.cont [8/16] 0.0, 128
    %1426 = vxpose.xlu0.b32.cont [9/16] 0.0, 128
    %1427 = vxpose.xlu0.b32.cont [10/16] 0.0, 128
    %1428 = vxpose.xlu0.b32.cont [11/16] 0.0, 128
    %1429 = vxpose.xlu0.b32.cont [12/16] 0.0, 128
    %1430 = vxpose.xlu0.b32.cont [13/16] 0.0, 128
    %1431 = vxpose.xlu0.b32.cont [14/16] 0.0, 128
    %1432 = vxpose.xlu0.b32.cont [15/16] 0.0, 128
    %1433 = vxpose.xlu0.b32.end [16/16] 0.0, 128
    %v1434 = vpop.trf.xlu0
    %v1435 = vpop.trf.xlu0
    %v1436 = vpop.trf.xlu0
    %v1437 = vpop.trf.xlu0
    %v1438 = vpop.trf.xlu0
    %v1439 = vpop.trf.xlu0
    %v1440 = vpop.trf.xlu0
    %v1441 = vpop.trf.xlu0
    %v1442 = vpop.trf.xlu0
    %v1443 = vpop.trf.xlu0
    %v1444 = vpop.trf.xlu0
    %v1445 = vpop.trf.xlu0
    %v1446 = vpop.trf.xlu0
    %v1447 = vpop.trf.xlu0
    %v1448 = vpop.trf.xlu0
    %v1449 = vpop.trf.xlu0
    %1450 = vxpose.xlu0.b32.start [1/16] %v519, 128
    %1451 = vxpose.xlu0.b32.cont [2/16] 0.0, 128
    %1452 = vxpose.xlu0.b32.cont [3/16] 0.0, 128
    %1453 = vxpose.xlu0.b32.cont [4/16] 0.0, 128
    %1454 = vxpose.xlu0.b32.cont [5/16] 0.0, 128
    %1455 = vxpose.xlu0.b32.cont [6/16] 0.0, 128
    %1456 = vxpose.xlu0.b32.cont [7/16] 0.0, 128
    %1457 = vxpose.xlu0.b32.cont [8/16] 0.0, 128
    %1458 = vxpose.xlu0.b32.cont [9/16] 0.0, 128
    %1459 = vxpose.xlu0.b32.cont [10/16] 0.0, 128
    %1460 = vxpose.xlu0.b32.cont [11/16] 0.0, 128
    %1461 = vxpose.xlu0.b32.cont [12/16] 0.0, 128
    %1462 = vxpose.xlu0.b32.cont [13/16] 0.0, 128
    %1463 = vxpose.xlu0.b32.cont [14/16] 0.0, 128
    %1464 = vxpose.xlu0.b32.cont [15/16] 0.0, 128
    %1465 = vxpose.xlu0.b32.end [16/16] 0.0, 128
    %v1466 = vpop.trf.xlu0
    %v1467 = vpop.trf.xlu0
    %v1468 = vpop.trf.xlu0
    %v1469 = vpop.trf.xlu0
    %v1470 = vpop.trf.xlu0
    %v1471 = vpop.trf.xlu0
    %v1472 = vpop.trf.xlu0
    %v1473 = vpop.trf.xlu0
    %v1474 = vpop.trf.xlu0
    %v1475 = vpop.trf.xlu0
    %v1476 = vpop.trf.xlu0
    %v1477 = vpop.trf.xlu0
    %v1478 = vpop.trf.xlu0
    %v1479 = vpop.trf.xlu0
    %v1480 = vpop.trf.xlu0
    %v1481 = vpop.trf.xlu0
    %1482 = vxpose.xlu0.b32.start [1/16] %v513, 128
    %1483 = vxpose.xlu0.b32.cont [2/16] 0.0, 128
    %1484 = vxpose.xlu0.b32.cont [3/16] 0.0, 128
    %1485 = vxpose.xlu0.b32.cont [4/16] 0.0, 128
    %1486 = vxpose.xlu0.b32.cont [5/16] 0.0, 128
    %1487 = vxpose.xlu0.b32.cont [6/16] 0.0, 128
    %1488 = vxpose.xlu0.b32.cont [7/16] 0.0, 128
    %1489 = vxpose.xlu0.b32.cont [8/16] 0.0, 128
    %1490 = vxpose.xlu0.b32.cont [9/16] 0.0, 128
    %1491 = vxpose.xlu0.b32.cont [10/16] 0.0, 128
    %1492 = vxpose.xlu0.b32.cont [11/16] 0.0, 128
    %1493 = vxpose.xlu0.b32.cont [12/16] 0.0, 128
    %1494 = vxpose.xlu0.b32.cont [13/16] 0.0, 128
    %1495 = vxpose.xlu0.b32.cont [14/16] 0.0, 128
    %1496 = vxpose.xlu0.b32.cont [15/16] 0.0, 128
    %1497 = vxpose.xlu0.b32.end [16/16] 0.0, 128
    %v1498 = vpop.trf.xlu0
    %v1499 = vpop.trf.xlu0
    %v1500 = vpop.trf.xlu0
    %v1501 = vpop.trf.xlu0
    %v1502 = vpop.trf.xlu0
    %v1503 = vpop.trf.xlu0
    %v1504 = vpop.trf.xlu0
    %v1505 = vpop.trf.xlu0
    %v1506 = vpop.trf.xlu0
    %v1507 = vpop.trf.xlu0
    %v1508 = vpop.trf.xlu0
    %v1509 = vpop.trf.xlu0
    %v1510 = vpop.trf.xlu0
    %v1511 = vpop.trf.xlu0
    %v1512 = vpop.trf.xlu0
    %v1513 = vpop.trf.xlu0
    %1514 = vxpose.xlu0.b32.start [1/16] %v521, 128
    %1515 = vxpose.xlu0.b32.cont [2/16] 0.0, 128
    %1516 = vxpose.xlu0.b32.cont [3/16] 0.0, 128
    %1517 = vxpose.xlu0.b32.cont [4/16] 0.0, 128
    %1518 = vxpose.xlu0.b32.cont [5/16] 0.0, 128
    %1519 = vxpose.xlu0.b32.cont [6/16] 0.0, 128
    %1520 = vxpose.xlu0.b32.cont [7/16] 0.0, 128
    %1521 = vxpose.xlu0.b32.cont [8/16] 0.0, 128
    %1522 = vxpose.xlu0.b32.cont [9/16] 0.0, 128
    %1523 = vxpose.xlu0.b32.cont [10/16] 0.0, 128
    %1524 = vxpose.xlu0.b32.cont [11/16] 0.0, 128
    %1525 = vxpose.xlu0.b32.cont [12/16] 0.0, 128
    %1526 = vxpose.xlu0.b32.cont [13/16] 0.0, 128
    %1527 = vxpose.xlu0.b32.cont [14/16] 0.0, 128
    %1528 = vxpose.xlu0.b32.cont [15/16] 0.0, 128
    %1529 = vxpose.xlu0.b32.end [16/16] 0.0, 128
    %v1530 = vpop.trf.xlu0
    %v1531 = vpop.trf.xlu0
    %v1532 = vpop.trf.xlu0
    %v1533 = vpop.trf.xlu0
    %v1534 = vpop.trf.xlu0
    %v1535 = vpop.trf.xlu0
    %v1536 = vpop.trf.xlu0
    %v1537 = vpop.trf.xlu0
    %v1538 = vpop.trf.xlu0
    %v1539 = vpop.trf.xlu0
    %v1540 = vpop.trf.xlu0
    %v1541 = vpop.trf.xlu0
    %v1542 = vpop.trf.xlu0
    %v1543 = vpop.trf.xlu0
    %v1544 = vpop.trf.xlu0
    %v1545 = vpop.trf.xlu0
    %v1546 = vrot.slane %v602, 4
    %v1547 = vsel %vm298, %v1546, %v538
    %v1549 = vunpack.c.l.s4 1983009808
    %v1550 = vunpack.c.0.s8 %v1549
    %v1551 = vperm.slane %v1547, %v1550
    %v1552 = vrot.slane %v634, 4
    %v1553 = vsel %vm298, %v1552, %v570
    %v1555 = vunpack.c.l.s4 1983009808
    %v1556 = vunpack.c.0.s8 %v1555
    %v1557 = vperm.slane %v1553, %v1556
    %v1558 = vrot.slane %v730, 4
    %v1559 = vsel %vm298, %v1558, %v666
    %v1561 = vunpack.c.l.s4 1983009808
    %v1562 = vunpack.c.0.s8 %v1561
    %v1563 = vperm.slane %v1559, %v1562
    %v1564 = vrot.slane %v762, 4
    %v1565 = vsel %vm298, %v1564, %v698
    %v1567 = vunpack.c.l.s4 1983009808
    %v1568 = vunpack.c.0.s8 %v1567
    %v1569 = vperm.slane %v1565, %v1568
    %v1570 = vrot.slane %v1557, 4
    %v1571 = vsel %vm298, %v1570, %v1551
    %v1573 = vunpack.c.l.s4 1934713408
    %v1574 = vunpack.c.0.s8 %v1573
    %v1575 = vperm.slane %v1571, %v1574
    %v1576 = vrot.slane %v1569, 4
    %v1577 = vsel %vm298, %v1576, %v1563
    %v1579 = vunpack.c.l.s4 1934713408
    %v1580 = vunpack.c.0.s8 %v1579
    %v1581 = vperm.slane %v1577, %v1580
    %v1582 = vrot.slane %v1581, 4
    %v1583 = vsel %vm298, %v1582, %v1575
    %v1584 = vrot.slane %v1575, 4
    %v1585 = vsel %vm298, %v1581, %v1584
    %v1586 = vrot.slane %v858, 4
    %v1587 = vsel %vm298, %v1586, %v794
    %v1589 = vunpack.c.l.s4 1983009808
    %v1590 = vunpack.c.0.s8 %v1589
    %v1591 = vperm.slane %v1587, %v1590
    %v1592 = vrot.slane %v890, 4
    %v1593 = vsel %vm298, %v1592, %v826
    %v1595 = vunpack.c.l.s4 1983009808
    %v1596 = vunpack.c.0.s8 %v1595
    %v1597 = vperm.slane %v1593, %v1596
    %v1598 = vrot.slane %v986, 4
    %v1599 = vsel %vm298, %v1598, %v922
    %v1601 = vunpack.c.l.s4 1983009808
    %v1602 = vunpack.c.0.s8 %v1601
    %v1603 = vperm.slane %v1599, %v1602
    %v1604 = vrot.slane %v1018, 4
    %v1605 = vsel %vm298, %v1604, %v954
    %v1607 = vunpack.c.l.s4 1983009808
    %v1608 = vunpack.c.0.s8 %v1607
    %v1609 = vperm.slane %v1605, %v1608
    %v1610 = vrot.slane %v1597, 4
    %v1611 = vsel %vm298, %v1610, %v1591
    %v1613 = vunpack.c.l.s4 1934713408
    %v1614 = vunpack.c.0.s8 %v1613
    %v1615 = vperm.slane %v1611, %v1614
    %v1616 = vrot.slane %v1609, 4
    %v1617 = vsel %vm298, %v1616, %v1603
    %v1619 = vunpack.c.l.s4 1934713408
    %v1620 = vunpack.c.0.s8 %v1619
    %v1621 = vperm.slane %v1617, %v1620
    %v1622 = vrot.slane %v1621, 4
    %v1623 = vsel %vm298, %v1622, %v1615
    %v1624 = vrot.slane %v1615, 4
    %v1625 = vsel %vm298, %v1621, %v1624
    %v1626 = vrot.slane %v1114, 4
    %v1627 = vsel %vm298, %v1626, %v1050
    %v1629 = vunpack.c.l.s4 1983009808
    %v1630 = vunpack.c.0.s8 %v1629
    %v1631 = vperm.slane %v1627, %v1630
    %v1632 = vrot.slane %v1146, 4
    %v1633 = vsel %vm298, %v1632, %v1082
    %v1635 = vunpack.c.l.s4 1983009808
    %v1636 = vunpack.c.0.s8 %v1635
    %v1637 = vperm.slane %v1633, %v1636
    %v1638 = vrot.slane %v1242, 4
    %v1639 = vsel %vm298, %v1638, %v1178
    %v1641 = vunpack.c.l.s4 1983009808
    %v1642 = vunpack.c.0.s8 %v1641
    %v1643 = vperm.slane %v1639, %v1642
    %v1644 = vrot.slane %v1274, 4
    %v1645 = vsel %vm298, %v1644, %v1210
    %v1647 = vunpack.c.l.s4 1983009808
    %v1648 = vunpack.c.0.s8 %v1647
    %v1649 = vperm.slane %v1645, %v1648
    %v1650 = vrot.slane %v1637, 4
    %v1651 = vsel %vm298, %v1650, %v1631
    %v1653 = vunpack.c.l.s4 1934713408
    %v1654 = vunpack.c.0.s8 %v1653
    %v1655 = vperm.slane %v1651, %v1654
    %v1656 = vrot.slane %v1649, 4
    %v1657 = vsel %vm298, %v1656, %v1643
    %v1659 = vunpack.c.l.s4 1934713408
    %v1660 = vunpack.c.0.s8 %v1659
    %v1661 = vperm.slane %v1657, %v1660
    %v1662 = vrot.slane %v1661, 4
    %v1663 = vsel %vm298, %v1662, %v1655
    %v1664 = vrot.slane %v1655, 4
    %v1665 = vsel %vm298, %v1661, %v1664
    %v1666 = vrot.slane %v1370, 4
    %v1667 = vsel %vm298, %v1666, %v1306
    %v1669 = vunpack.c.l.s4 1983009808
    %v1670 = vunpack.c.0.s8 %v1669
    %v1671 = vperm.slane %v1667, %v1670
    %v1672 = vrot.slane %v1402, 4
    %v1673 = vsel %vm298, %v1672, %v1338
    %v1675 = vunpack.c.l.s4 1983009808
    %v1676 = vunpack.c.0.s8 %v1675
    %v1677 = vperm.slane %v1673, %v1676
    %v1678 = vrot.slane %v1498, 4
    %v1679 = vsel %vm298, %v1678, %v1434
    %v1681 = vunpack.c.l.s4 1983009808
    %v1682 = vunpack.c.0.s8 %v1681
    %v1683 = vperm.slane %v1679, %v1682
    %v1684 = vrot.slane %v1530, 4
    %v1685 = vsel %vm298, %v1684, %v1466
    %v1687 = vunpack.c.l.s4 1983009808
    %v1688 = vunpack.c.0.s8 %v1687
    %v1689 = vperm.slane %v1685, %v1688
    %v1690 = vrot.slane %v1677, 4
    %v1691 = vsel %vm298, %v1690, %v1671
    %v1693 = vunpack.c.l.s4 1934713408
    %v1694 = vunpack.c.0.s8 %v1693
    %v1695 = vperm.slane %v1691, %v1694
    %v1696 = vrot.slane %v1689, 4
    %v1697 = vsel %vm298, %v1696, %v1683
    %v1699 = vunpack.c.l.s4 1934713408
    %v1700 = vunpack.c.0.s8 %v1699
    %v1701 = vperm.slane %v1697, %v1700
    %v1702 = vrot.slane %v1701, 4
    %v1703 = vsel %vm298, %v1702, %v1695
    %v1704 = vrot.slane %v1695, 4
    %v1705 = vsel %vm298, %v1701, %v1704
    %v1706 = vrot.slane %v1663, 4
    %v1707 = vsel %vm298, %v1706, %v1583
    %v1708 = vrot.slane %v1583, 4
    %v1709 = vsel %vm298, %v1663, %v1708
    %v1711 = vunpack.c.l.s4 1983009808
    %v1712 = vunpack.c.0.s8 %v1711
    %v1713 = vperm.slane %v1707, %v1712
    %v1715 = vunpack.c.l.s4 1983009808
    %v1716 = vunpack.c.0.s8 %v1715
    %v1717 = vperm.slane %v1709, %v1716
    %v1718 = vrot.slane %v1665, 4
    %v1719 = vsel %vm298, %v1718, %v1585
    %v1720 = vrot.slane %v1585, 4
    %v1721 = vsel %vm298, %v1665, %v1720
    %v1723 = vunpack.c.l.s4 1983009808
    %v1724 = vunpack.c.0.s8 %v1723
    %v1725 = vperm.slane %v1719, %v1724
    %v1727 = vunpack.c.l.s4 1983009808
    %v1728 = vunpack.c.0.s8 %v1727
    %v1729 = vperm.slane %v1721, %v1728
    %v1730 = vrot.slane %v1725, 4
    %v1731 = vsel %vm298, %v1730, %v1713
    %v1732 = vrot.slane %v1713, 4
    %v1733 = vsel %vm298, %v1725, %v1732
    %v1735 = vunpack.c.l.s4 1934713408
    %v1736 = vunpack.c.0.s8 %v1735
    %v1737 = vperm.slane %v1731, %v1736
    %v1739 = vunpack.c.l.s4 1934713408
    %v1740 = vunpack.c.0.s8 %v1739
    %v1741 = vperm.slane %v1733, %v1740
    %v1742 = vrot.slane %v1729, 4
    %v1743 = vsel %vm298, %v1742, %v1717
    %v1744 = vrot.slane %v1717, 4
    %v1745 = vsel %vm298, %v1729, %v1744
    %v1747 = vunpack.c.l.s4 1934713408
    %v1748 = vunpack.c.0.s8 %v1747
    %v1749 = vperm.slane %v1743, %v1748
    %v1751 = vunpack.c.l.s4 1934713408
    %v1752 = vunpack.c.0.s8 %v1751
    %v1753 = vperm.slane %v1745, %v1752
    %v1754 = vrot.slane %v1737, 4
    %v1755 = vsel %vm298, 0.0, %v1754
    %v1756 = vrot.slane %v1741, 4
    %v1757 = vsel %vm298, 0.0, %v1756
    %v1758 = vrot.slane %v1749, 4
    %v1759 = vsel %vm298, 0.0, %v1758
    %v1760 = vrot.slane %v1753, 4
    %v1761 = vsel %vm298, 0.0, %v1760
    %v1762 = vrot.slane %v1703, 4
    %v1763 = vsel %vm298, %v1762, %v1623
    %v1764 = vrot.slane %v1623, 4
    %v1765 = vsel %vm298, %v1703, %v1764
    %v1767 = vunpack.c.l.s4 1983009808
    %v1768 = vunpack.c.0.s8 %v1767
    %v1769 = vperm.slane %v1763, %v1768
    %v1771 = vunpack.c.l.s4 1983009808
    %v1772 = vunpack.c.0.s8 %v1771
    %v1773 = vperm.slane %v1765, %v1772
    %v1774 = vrot.slane %v1705, 4
    %v1775 = vsel %vm298, %v1774, %v1625
    %v1776 = vrot.slane %v1625, 4
    %v1777 = vsel %vm298, %v1705, %v1776
    %v1779 = vunpack.c.l.s4 1983009808
    %v1780 = vunpack.c.0.s8 %v1779
    %v1781 = vperm.slane %v1775, %v1780
    %v1783 = vunpack.c.l.s4 1983009808
    %v1784 = vunpack.c.0.s8 %v1783
    %v1785 = vperm.slane %v1777, %v1784
    %v1786 = vrot.slane %v1781, 4
    %v1787 = vsel %vm298, %v1786, %v1769
    %v1788 = vrot.slane %v1769, 4
    %v1789 = vsel %vm298, %v1781, %v1788
    %v1791 = vunpack.c.l.s4 1934713408
    %v1792 = vunpack.c.0.s8 %v1791
    %v1793 = vperm.slane %v1787, %v1792
    %v1795 = vunpack.c.l.s4 1934713408
    %v1796 = vunpack.c.0.s8 %v1795
    %v1797 = vperm.slane %v1789, %v1796
    %v1798 = vrot.slane %v1785, 4
    %v1799 = vsel %vm298, %v1798, %v1773
    %v1800 = vrot.slane %v1773, 4
    %v1801 = vsel %vm298, %v1785, %v1800
    %v1803 = vunpack.c.l.s4 1934713408
    %v1804 = vunpack.c.0.s8 %v1803
    %v1805 = vperm.slane %v1799, %v1804
    %v1807 = vunpack.c.l.s4 1934713408
    %v1808 = vunpack.c.0.s8 %v1807
    %v1809 = vperm.slane %v1801, %v1808
    %v1810 = vrot.slane %v1793, 4
    %v1811 = vsel %vm298, 0.0, %v1810
    %v1812 = vrot.slane %v1797, 4
    %v1813 = vsel %vm298, 0.0, %v1812
    %v1814 = vrot.slane %v1805, 4
    %v1815 = vsel %vm298, 0.0, %v1814
    %v1816 = vrot.slane %v1809, 4
    %v1817 = vsel %vm298, 0.0, %v1816
    %1819 = vrot.lane.b32.xlu0 %v1755, 4
    %v1820 = vpop.permute.xlu0 %1819
    %1823 = vrot.lane.b32.xlu0 %v1741, 8
    %v1824 = vpop.permute.xlu0 %1823
    %1827 = vrot.lane.b32.xlu0 %v1757, 12
    %v1828 = vpop.permute.xlu0 %1827
    %1831 = vrot.lane.b32.xlu0 %v1749, 16
    %v1832 = vpop.permute.xlu0 %1831
    %1835 = vrot.lane.b32.xlu0 %v1759, 20
    %v1836 = vpop.permute.xlu0 %1835
    %1839 = vrot.lane.b32.xlu0 %v1753, 24
    %v1840 = vpop.permute.xlu0 %1839
    %1843 = vrot.lane.b32.xlu0 %v1761, 28
    %v1844 = vpop.permute.xlu0 %1843
    %1847 = vrot.lane.b32.xlu0 %v1793, 32
    %v1848 = vpop.permute.xlu0 %1847
    %1851 = vrot.lane.b32.xlu0 %v1811, 36
    %v1852 = vpop.permute.xlu0 %1851
    %1855 = vrot.lane.b32.xlu0 %v1797, 40
    %v1856 = vpop.permute.xlu0 %1855
    %1859 = vrot.lane.b32.xlu0 %v1813, 44
    %v1860 = vpop.permute.xlu0 %1859
    %1863 = vrot.lane.b32.xlu0 %v1805, 48
    %v1864 = vpop.permute.xlu0 %1863
    %1867 = vrot.lane.b32.xlu0 %v1815, 52
    %v1868 = vpop.permute.xlu0 %1867
    %1871 = vrot.lane.b32.xlu0 %v1809, 56
    %v1872 = vpop.permute.xlu0 %1871
    %1875 = vrot.lane.b32.xlu0 %v1817, 60
    %v1876 = vpop.permute.xlu0 %1875
    %vm1878 = vcmask 31744
    %v1879 = vsel %vm1878, %v1737, %v1820
    %vm1880 = vcmask 64512
    %v1881 = vsel %vm1880, %v1879, %v1824
    %vm1882 = vcmask 97280
    %v1883 = vsel %vm1882, %v1881, %v1828
    %vm1884 = vcmask 130048
    %v1885 = vsel %vm1884, %v1883, %v1832
    %vm1886 = vcmask 162816
    %v1887 = vsel %vm1886, %v1885, %v1836
    %vm1888 = vcmask 195584
    %v1889 = vsel %vm1888, %v1887, %v1840
    %vm1890 = vcmask 228352
    %v1891 = vsel %vm1890, %v1889, %v1844
    %vm1892 = vcmask 261120
    %v1893 = vsel %vm1892, %v1891, %v1848
    %vm1894 = vcmask 293888
    %v1895 = vsel %vm1894, %v1893, %v1852
    %vm1896 = vcmask 326656
    %v1897 = vsel %vm1896, %v1895, %v1856
    %vm1898 = vcmask 359424
    %v1899 = vsel %vm1898, %v1897, %v1860
    %vm1900 = vcmask 392192
    %v1901 = vsel %vm1900, %v1899, %v1864
    %vm1902 = vcmask 424960
    %v1903 = vsel %vm1902, %v1901, %v1868
    %vm1904 = vcmask 457728
    %v1905 = vsel %vm1904, %v1903, %v1872
    %vm1906 = vcmask 490496
    %v1907 = vsel %vm1906, %v1905, %v1876
    %vm1908 = vcmask 519168
    %1909 = vst.msk [vmem:[#allocation5] sm:$0xf] %vm1908, %v1907
    // Predicated region
    $region10: #{tpu_custom_call.1} parent=1 // pred_check
      _
    $region11: #{tpu_custom_call.1} parent=1 // pred_check_branch
      %1911 = sbr.rel (0) target = $region13
    $region12: #{tpu_custom_call.1} parent=1 // pred_region
      %1913 = vsyncadd [#allocation4], 0
      %s1915 = sshll.u32 [#allocation5], 4
      %s1916 = int_to_ptr.vmem [resolvable:$true] %s1915
      %s1917 = sshll.u32 %s1, 4
      %s1918 = int_to_ptr.hbm [resolvable:$true] %s1917
      %1920 = dma.vmem_to_hbm [thread:$0]  %s1916, 64, %s1918, [#allocation4]
    $region13: #{tpu_custom_call.1} parent=1 // pred_fallthru
      _
    // Predicated region
    $region14: #{tpu_custom_call.1} parent=1 // pred_check
      _
    $region15: #{tpu_custom_call.1} parent=1 // pred_check_branch
      %1922 = sbr.rel (0) target = $region17
    $region16: #{tpu_custom_call.1} parent=1 // pred_region
      %1924 = dma.done [#allocation4], 64
    $region17: #{tpu_custom_call.1} parent=1 // pred_fallthru
      _
    %1925 = vsyncpa [#allocation3], 1
    %1926 = vsyncpa [#allocation4], 1

</llo_original>
